<compile_context>
chip_gen: v7x
topology: tpu7x:2x2x1
jax: 0.10.0
libtpu: 0.0.40
codegen_flags: <defaults>
</compile_context>

<pallas_src>
import functools

import jax
import jax.numpy as jnp
from jax.experimental import pallas as pl
from jax.experimental.pallas import tpu as pltpu


# ----------------------------------------------------------------------------
# in-kernel helpers
# ----------------------------------------------------------------------------
def _layernorm(x, w, b, eps=1e-6):
    # matches torch.nn.LayerNorm(eps=1e-6): biased variance over last dim
    mu = jnp.mean(x, axis=-1, keepdims=True)
    xc = x - mu
    var = jnp.mean(xc * xc, axis=-1, keepdims=True)
    return xc * jax.lax.rsqrt(var + eps) * w + b


def _erf(x):
    # Abramowitz & Stegun 7.1.26 polynomial erf (|err| < 1.5e-7).
    # TODO(synk): exact lax.erf may not have a Mosaic lowering; this matches
    # torch's erf-based GELU to ~float32 precision.
    a1, a2, a3, a4, a5 = (0.254829592, -0.284496736, 1.421413741,
                          -1.453152027, 1.061405429)
    p = 0.3275911
    s = jnp.where(x >= 0.0, 1.0, -1.0)
    z = jnp.abs(x)
    t = 1.0 / (1.0 + p * z)
    poly = ((((a5 * t + a4) * t + a3) * t + a2) * t + a1) * t
    return s * (1.0 - poly * jnp.exp(-z * z))


def _gelu(x):
    # exact (erf-based) GELU == torch.nn.GELU() default
    return 0.5 * x * (1.0 + _erf(x * 0.7071067811865476))


# dot_general dimension numbers for A @ B.T (standard attention "NT" matmul)
_TRANS_B = (((1,), (1,)), ((), ()))


# ----------------------------------------------------------------------------
# fused ViT encoder kernel: grid = (batch, depth)
# ----------------------------------------------------------------------------
def _vit_kernel(patches_ref, pw_ref, pos_ref,
                ln1w_ref, ln1b_ref, qkvw_ref, qkvb_ref,
                projw_ref, projb_ref, ln2w_ref, ln2b_ref,
                fc1w_ref, fc1b_ref, fc2w_ref, fc2b_ref,
                nw_ref, nb_ref,
                o_ref,
                tok_ref, ctx_ref,
                *, num_heads, scale):
    d = pl.program_id(1)
    last = pl.num_programs(1) - 1

    # ---- depth step 0: patch embedding into the resident token buffer ------
    # patches_ref row 0 is a zero row (cls slot); pos_ref already folds in the
    # patch-embed bias (rows 1..) and the cls token (row 0).
    @pl.when(d == 0)
    def _():
        pe = jnp.dot(patches_ref[0], pw_ref[...],
                     preferred_element_type=jnp.float32)            # (N, D)
        tok_ref[...] = pe + pos_ref[...]

    x = tok_ref[...]                                                 # (N, D) f32
    N, D = x.shape
    hd = D // num_heads

    # ---- attention branch: x + proj(softmax(q k^T * scale) v) --------------
    h1 = _layernorm(x, ln1w_ref[0], ln1b_ref[0])
    qkv = (jnp.dot(h1.astype(jnp.bfloat16), qkvw_ref[0],
                   preferred_element_type=jnp.float32)
           + qkvb_ref[0])                                            # (N, 3D)
    q = (qkv[:, :D] * scale).astype(jnp.bfloat16)   # fold scale into q
    k = qkv[:, D:2 * D].astype(jnp.bfloat16)
    v = qkv[:, 2 * D:].astype(jnp.bfloat16)

    # per-head scores/AV; context written head-major into a (N, D) VMEM buffer
    # so no lane-dim concatenation is needed and the output projection stays a
    # single dense matmul.
    for hh in range(num_heads):                      # static unroll
        sl = slice(hh * hd, (hh + 1) * hd)
        qh, kh, vh = q[:, sl], k[:, sl], v[:, sl]
        s = jax.lax.dot_general(qh, kh, _TRANS_B,
                                preferred_element_type=jnp.float32)  # (N, N)
        s = s - jnp.max(s, axis=-1, keepdims=True)
        p = jnp.exp(s)
        p = p * pl.reciprocal(jnp.sum(p, axis=-1, keepdims=True), approx=True)
        ctx_ref[:, sl] = jnp.dot(p.astype(jnp.bfloat16), vh,
                                 preferred_element_type=jnp.float32)

    attn = (jnp.dot(ctx_ref[...].astype(jnp.bfloat16), projw_ref[0],
                    preferred_element_type=jnp.float32)
            + projb_ref[0])
    x = x + attn

    # ---- MLP branch: x + fc2(gelu(fc1(ln2(x)))) -----------------------------
    h2 = _layernorm(x, ln2w_ref[0], ln2b_ref[0])
    h2 = (jnp.dot(h2.astype(jnp.bfloat16), fc1w_ref[0],
                  preferred_element_type=jnp.float32)
          + fc1b_ref[0])
    h2 = _gelu(h2)
    h2 = (jnp.dot(h2.astype(jnp.bfloat16), fc2w_ref[0],
                  preferred_element_type=jnp.float32)
          + fc2b_ref[0])
    x = x + h2

    tok_ref[...] = x

    # ---- last depth step: fused final encoder LayerNorm + single HBM write --
    @pl.when(d == last)
    def _():
        o_ref[0] = _layernorm(x, nw_ref[...], nb_ref[...]).astype(o_ref.dtype)


# ----------------------------------------------------------------------------
# parameters (deterministic, synthetic — mirrors the module's __init__ shapes)
# ----------------------------------------------------------------------------
def init_params(key, *, in_chans, patch_size, embed_dim, depth, mlp_ratio,
                num_patches):
    D = embed_dim
    Hm = int(D * mlp_ratio)
    K = in_chans * patch_size * patch_size
    keys = jax.random.split(key, 3 + 4 * depth)

    def nrm(k, shape, std=0.02):
        return std * jax.random.normal(k, shape, dtype=jnp.float32)

    # Conv2d weight (D, C, P, P) -> matmul weight (C*P*P, D)
    conv_w = nrm(keys[0], (D, in_chans, patch_size, patch_size))

    # torch Linear weight is (out, in); we store transposed (in, out),
    # stacked on a leading depth axis, bf16 for the MXU.
    qkv_w = jnp.stack([nrm(keys[3 + 4 * i], (3 * D, D)).T for i in range(depth)])
    proj_w = jnp.stack([nrm(keys[4 + 4 * i], (D, D)).T for i in range(depth)])
    fc1_w = jnp.stack([nrm(keys[5 + 4 * i], (Hm, D)).T for i in range(depth)])
    fc2_w = jnp.stack([nrm(keys[6 + 4 * i], (D, Hm)).T for i in range(depth)])

    return {
        'patch_w': conv_w.reshape(D, K).T.astype(jnp.bfloat16),   # (K, D)
        'patch_b': jnp.zeros((1, D), jnp.float32),
        'cls_token': nrm(keys[1], (1, D)),
        'pos_embed': nrm(keys[2], (num_patches + 1, D)),
        'norm_w': jnp.ones((1, D), jnp.float32),
        'norm_b': jnp.zeros((1, D), jnp.float32),
        'ln1_w': jnp.ones((depth, 1, D), jnp.float32),
        'ln1_b': jnp.zeros((depth, 1, D), jnp.float32),
        'qkv_w': qkv_w.astype(jnp.bfloat16),                      # (depth, D, 3D)
        'qkv_b': jnp.zeros((depth, 1, 3 * D), jnp.float32),       # qkv_bias=True
        'proj_w': proj_w.astype(jnp.bfloat16),                    # (depth, D, D)
        'proj_b': jnp.zeros((depth, 1, D), jnp.float32),
        'ln2_w': jnp.ones((depth, 1, D), jnp.float32),
        'ln2_b': jnp.zeros((depth, 1, D), jnp.float32),
        'fc1_w': fc1_w.astype(jnp.bfloat16),                      # (depth, D, Hm)
        'fc1_b': jnp.zeros((depth, 1, Hm), jnp.float32),
        'fc2_w': fc2_w.astype(jnp.bfloat16),                      # (depth, Hm, D)
        'fc2_b': jnp.zeros((depth, 1, D), jnp.float32),
    }


# ----------------------------------------------------------------------------
# full forward: XLA does only layout (patch unfold) + tiny param folding;
# everything else runs inside ONE fused Pallas kernel.
# ----------------------------------------------------------------------------
def vit_forward(x, params, patch_size, num_heads):
    B, C, Himg, Wimg = x.shape
    P = patch_size
    Hp, Wp = Himg // P, Wimg // P
    N, D = params['pos_embed'].shape                 # N = num_patches + 1
    K = C * P * P
    Hm = params['fc1_w'].shape[-1]
    depth = params['qkv_w'].shape[0]
    scale = (D // num_heads) ** -0.5

    # Conv2d(k=P, stride=P) == extract non-overlapping patches + matmul.
    # Prepend a zero row per image as the cls-token slot so the kernel's patch
    # matmul directly produces N rows (no in-kernel concat).
    patches = x.reshape(B, C, Hp, P, Wp, P).transpose(0, 2, 4, 1, 3, 5)
    patches = patches.reshape(B, Hp * Wp, K)
    patches = jnp.concatenate(
        [jnp.zeros((B, 1, K), patches.dtype), patches], axis=1)
    patches = patches.astype(jnp.bfloat16)           # (B, N, K)

    # Fold patch-embed bias (rows 1..), cls token (row 0) and pos_embed into
    # one additive term; pos_drop / attn_drop / drop_path are identity (0.0).
    pos_adj = params['pos_embed'] + params['patch_b']
    pos_adj = pos_adj.at[0].set(params['pos_embed'][0] + params['cls_token'][0])

    kernel = functools.partial(_vit_kernel, num_heads=num_heads, scale=scale)
    per_batch = lambda b, d: (b, 0, 0)
    per_layer = lambda b, d: (d, 0, 0)
    shared2 = lambda b, d: (0, 0)

    return pl.pallas_call(
        kernel,
        out_shape=jax.ShapeDtypeStruct((B, N, D), jnp.float32),
        grid=(B, depth),
        in_specs=[
            pl.BlockSpec((1, N, K), per_batch),        # patches (+ cls zero row)
            pl.BlockSpec((K, D), shared2),             # patch_w (bf16)
            pl.BlockSpec((N, D), shared2),             # pos_adj (f32)
            pl.BlockSpec((1, 1, D), per_layer),        # ln1_w
            pl.BlockSpec((1, 1, D), per_layer),        # ln1_b
            pl.BlockSpec((1, D, 3 * D), per_layer),    # qkv_w
            pl.BlockSpec((1, 1, 3 * D), per_layer),    # qkv_b
            pl.BlockSpec((1, D, D), per_layer),        # proj_w
            pl.BlockSpec((1, 1, D), per_layer),        # proj_b
            pl.BlockSpec((1, 1, D), per_layer),        # ln2_w
            pl.BlockSpec((1, 1, D), per_layer),        # ln2_b
            pl.BlockSpec((1, D, Hm), per_layer),       # fc1_w
            pl.BlockSpec((1, 1, Hm), per_layer),       # fc1_b
            pl.BlockSpec((1, Hm, D), per_layer),       # fc2_w
            pl.BlockSpec((1, 1, D), per_layer),        # fc2_b
            pl.BlockSpec((1, D), shared2),             # norm_w
            pl.BlockSpec((1, D), shared2),             # norm_b
        ],
        out_specs=pl.BlockSpec((1, N, D), per_batch),
        scratch_shapes=[pltpu.VMEM((N, D), jnp.float32),   # resident tokens
                        pltpu.VMEM((N, D), jnp.float32)],  # head-major attn ctx
        compiler_params=pltpu.CompilerParams(
            dimension_semantics=("parallel", "arbitrary")),
    )(patches, params['patch_w'], pos_adj,
      params['ln1_w'], params['ln1_b'], params['qkv_w'], params['qkv_b'],
      params['proj_w'], params['proj_b'], params['ln2_w'], params['ln2_b'],
      params['fc1_w'], params['fc1_b'], params['fc2_w'], params['fc2_b'],
      params['norm_w'], params['norm_b'])


# ----------------------------------------------------------------------------
# pure-JAX reference (mirrors the torch forward; same bf16 matmul casts as the
# kernel so the comparison isolates kernel bugs, not dtype policy).
# ----------------------------------------------------------------------------
def vit_reference(x, params, patch_size, num_heads):
    B, C, Himg, Wimg = x.shape
    P = patch_size
    Hp, Wp = Himg // P, Wimg // P
    N, D = params['pos_embed'].shape
    depth = params['qkv_w'].shape[0]
    hd = D // num_heads
    scale = hd ** -0.5

    def ln(t, w, b, eps=1e-6):
        mu = t.mean(-1, keepdims=True)
        tc = t - mu
        var = (tc * tc).mean(-1, keepdims=True)
        return tc * jax.lax.rsqrt(var + eps) * w + b

    def mm(a, w):
        return jnp.einsum('bnk,kd->bnd', a.astype(jnp.bfloat16), w,
                          preferred_element_type=jnp.float32)

    patches = x.reshape(B, C, Hp, P, Wp, P).transpose(0, 2, 4, 1, 3, 5)
    patches = patches.reshape(B, Hp * Wp, C * P * P)
    pe = mm(patches, params['patch_w']) + params['patch_b']
    cls = jnp.broadcast_to(params['cls_token'][None], (B, 1, D))
    xt = jnp.concatenate([cls, pe], axis=1) + params['pos_embed'][None]

    for i in range(depth):
        h = ln(xt, params['ln1_w'][i], params['ln1_b'][i])
        qkv = mm(h, params['qkv_w'][i]) + params['qkv_b'][i]
        q, k, v = qkv[..., :D], qkv[..., D:2 * D], qkv[..., 2 * D:]
        split = lambda t: t.reshape(B, N, num_heads, hd).transpose(0, 2, 1, 3)
        qh = (split(q) * scale).astype(jnp.bfloat16)
        kh = split(k).astype(jnp.bfloat16)
        vh = split(v).astype(jnp.bfloat16)
        s = jnp.einsum('bhqe,bhke->bhqk', qh, kh,
                       preferred_element_type=jnp.float32)
        s = s - s.max(-1, keepdims=True)
        p = jnp.exp(s)
        p = p / p.sum(-1, keepdims=True)
        ctx = jnp.einsum('bhqk,bhke->bhqe', p.astype(jnp.bfloat16), vh,
                         preferred_element_type=jnp.float32)
        ctx = ctx.transpose(0, 2, 1, 3).reshape(B, N, D)
        xt = xt + mm(ctx, params['proj_w'][i]) + params['proj_b'][i]

        h2 = ln(xt, params['ln2_w'][i], params['ln2_b'][i])
        h2 = mm(h2, params['fc1_w'][i]) + params['fc1_b'][i]
        h2 = 0.5 * h2 * (1.0 + jax.lax.erf(h2 * 0.7071067811865476))
        h2 = mm(h2, params['fc2_w'][i]) + params['fc2_b'][i]
        xt = xt + h2

    return ln(xt, params['norm_w'], params['norm_b'])


if __name__ == "__main__":
    # small ViT config consistent with the module's constructor
    B, C, IMG, P = 2, 4, 16, 4
    D, DEPTH, HEADS, MLP_RATIO = 32, 2, 4, 4.0
    num_patches = (IMG // P) ** 2

    key = jax.random.PRNGKey(0)
    kx, kp = jax.random.split(key)
    x = jax.random.normal(kx, (B, C, IMG, IMG), dtype=jnp.float32)
    params = init_params(kp, in_chans=C, patch_size=P, embed_dim=D,
                         depth=DEPTH, mlp_ratio=MLP_RATIO,
                         num_patches=num_patches)

    fwd = jax.jit(vit_forward, static_argnames=("patch_size", "num_heads"))
    out = fwd(x, params, patch_size=P, num_heads=HEADS)
    jax.block_until_ready(out)

    assert out.shape == (B, num_patches + 1, D), out.shape
    assert bool(jnp.all(jnp.isfinite(out)))

    ref = vit_reference(x, params, patch_size=P, num_heads=HEADS)
    assert bool(jnp.allclose(out, ref, atol=3e-2, rtol=3e-2)), (
        float(jnp.max(jnp.abs(out - ref))))

    print("KERNEL_OK")
</pallas_src>

<mosaic_0001>
module attributes {stable_mosaic.version = 11 : i64} {
  func.func @_vit_kernel(%arg0: i32, %arg1: i32, %arg2: memref<1x17x64xbf16, #tpu.memory_space<vmem>>, %arg3: memref<64x32xbf16, #tpu.memory_space<vmem>>, %arg4: memref<17x32xf32, #tpu.memory_space<vmem>>, %arg5: memref<1x1x32xf32, #tpu.memory_space<vmem>>, %arg6: memref<1x1x32xf32, #tpu.memory_space<vmem>>, %arg7: memref<1x32x96xbf16, #tpu.memory_space<vmem>>, %arg8: memref<1x1x96xf32, #tpu.memory_space<vmem>>, %arg9: memref<1x32x32xbf16, #tpu.memory_space<vmem>>, %arg10: memref<1x1x32xf32, #tpu.memory_space<vmem>>, %arg11: memref<1x1x32xf32, #tpu.memory_space<vmem>>, %arg12: memref<1x1x32xf32, #tpu.memory_space<vmem>>, %arg13: memref<1x32x128xbf16, #tpu.memory_space<vmem>>, %arg14: memref<1x1x128xf32, #tpu.memory_space<vmem>>, %arg15: memref<1x128x32xbf16, #tpu.memory_space<vmem>>, %arg16: memref<1x1x32xf32, #tpu.memory_space<vmem>>, %arg17: memref<1x32xf32, #tpu.memory_space<vmem>>, %arg18: memref<1x32xf32, #tpu.memory_space<vmem>>, %arg19: memref<1x17x32xf32, #tpu.memory_space<vmem>>, %arg20: memref<17x32xf32, #tpu.memory_space<vmem>>, %arg21: memref<17x32xf32, #tpu.memory_space<vmem>>) attributes {dimension_semantics = [#tpu.dimension_semantics<parallel>, #tpu.dimension_semantics<arbitrary>], iteration_bounds = array<i64: 2, 2>, scalar_prefetch = 0 : i64, scratch_operands = 2 : i64, tpu.core_type = #tpu.core_type<tc>, window_params = [{transform_indices = @transform_0, window_bounds = array<i64: 1, 17, 64>}, {pipeline_mode = #tpu.pipeline_mode<synchronous>, transform_indices = @transform_1, window_bounds = array<i64: 64, 32>}, {pipeline_mode = #tpu.pipeline_mode<synchronous>, transform_indices = @transform_2, window_bounds = array<i64: 17, 32>}, {transform_indices = @transform_3, window_bounds = array<i64: 1, 1, 32>}, {transform_indices = @transform_4, window_bounds = array<i64: 1, 1, 32>}, {transform_indices = @transform_5, window_bounds = array<i64: 1, 32, 96>}, {transform_indices = @transform_6, window_bounds = array<i64: 1, 1, 96>}, {transform_indices = @transform_7, window_bounds = array<i64: 1, 32, 32>}, {transform_indices = @transform_8, window_bounds = array<i64: 1, 1, 32>}, {transform_indices = @transform_9, window_bounds = array<i64: 1, 1, 32>}, {transform_indices = @transform_10, window_bounds = array<i64: 1, 1, 32>}, {transform_indices = @transform_11, window_bounds = array<i64: 1, 32, 128>}, {transform_indices = @transform_12, window_bounds = array<i64: 1, 1, 128>}, {transform_indices = @transform_13, window_bounds = array<i64: 1, 128, 32>}, {transform_indices = @transform_14, window_bounds = array<i64: 1, 1, 32>}, {pipeline_mode = #tpu.pipeline_mode<synchronous>, transform_indices = @transform_15, window_bounds = array<i64: 1, 32>}, {pipeline_mode = #tpu.pipeline_mode<synchronous>, transform_indices = @transform_16, window_bounds = array<i64: 1, 32>}, {transform_indices = @transform_17, window_bounds = array<i64: 1, 17, 32>}]} {
    %c0_i32 = arith.constant 0 : i32
    %0 = arith.cmpi eq, %arg1, %c0_i32 : i32
    %1 = arith.extui %0 : i1 to i32
    %c0_i32_0 = arith.constant 0 : i32
    %2 = arith.cmpi ne, %1, %c0_i32_0 : i32
    scf.if %2 {
      %c0_94 = arith.constant 0 : index
      %c0_95 = arith.constant 0 : index
      %c0_96 = arith.constant 0 : index
      %208 = vector.load %arg2[%c0_94, %c0_95, %c0_96] : memref<1x17x64xbf16, #tpu.memory_space<vmem>>, vector<1x17x64xbf16>
      %209 = vector.shape_cast %208 : vector<1x17x64xbf16> to vector<17x64xbf16>
      %c0_97 = arith.constant 0 : index
      %c0_98 = arith.constant 0 : index
      %210 = vector.load %arg3[%c0_97, %c0_98] : memref<64x32xbf16, #tpu.memory_space<vmem>>, vector<64x32xbf16>
      %cst_99 = arith.constant dense<0.000000e+00> : vector<17x32xf32>
      %211 = tpu.matmul %209, %210, %cst_99 {dimension_numbers = #tpu.dot_dimension_numbers<[1], [0], [0], [1], [0, 0, 1, 1], [], []>} : vector<17x64xbf16>, vector<64x32xbf16>, vector<17x32xf32> -> vector<17x32xf32>
      %c0_100 = arith.constant 0 : index
      %c0_101 = arith.constant 0 : index
      %212 = vector.load %arg4[%c0_100, %c0_101] : memref<17x32xf32, #tpu.memory_space<vmem>>, vector<17x32xf32>
      %213 = arith.addf %211, %212 : vector<17x32xf32>
      %c0_102 = arith.constant 0 : index
      %c0_103 = arith.constant 0 : index
      %214 = vector.load %arg20[%c0_102, %c0_103] : memref<17x32xf32, #tpu.memory_space<vmem>>, vector<17x32xf32>
      tpu.vector_store %arg20[%c0_102, %c0_103], %213 {strides = array<i32>} : memref<17x32xf32, #tpu.memory_space<vmem>>, vector<17x32xf32>,
    } else {
    }
    %c0 = arith.constant 0 : index
    %c0_1 = arith.constant 0 : index
    %3 = vector.load %arg20[%c0, %c0_1] : memref<17x32xf32, #tpu.memory_space<vmem>>, vector<17x32xf32>
    %c0_2 = arith.constant 0 : index
    %c0_3 = arith.constant 0 : index
    %c0_4 = arith.constant 0 : index
    %4 = vector.load %arg5[%c0_2, %c0_3, %c0_4] : memref<1x1x32xf32, #tpu.memory_space<vmem>>, vector<1x1x32xf32>
    %5 = vector.shape_cast %4 : vector<1x1x32xf32> to vector<1x32xf32>
    %c0_5 = arith.constant 0 : index
    %c0_6 = arith.constant 0 : index
    %c0_7 = arith.constant 0 : index
    %6 = vector.load %arg6[%c0_5, %c0_6, %c0_7] : memref<1x1x32xf32, #tpu.memory_space<vmem>>, vector<1x1x32xf32>
    %7 = vector.shape_cast %6 : vector<1x1x32xf32> to vector<1x32xf32>
    %cst = arith.constant dense<0.000000e+00> : vector<17xf32>
    %8 = vector.multi_reduction <add>, %3, %cst [1] : vector<17x32xf32> to vector<17xf32>
    %9 = vector.shape_cast %8 : vector<17xf32> to vector<17x1xf32>
    %cst_8 = arith.constant 3.200000e+01 : f32
    %10 = vector.broadcast %cst_8 : f32 to vector<17x1xf32>
    %11 = arith.divf %9, %10 : vector<17x1xf32>
    %12 = vector.broadcast %11 : vector<17x1xf32> to vector<17x32xf32>
    %13 = arith.subf %3, %12 : vector<17x32xf32>
    %14 = arith.mulf %13, %13 : vector<17x32xf32>
    %cst_9 = arith.constant dense<0.000000e+00> : vector<17xf32>
    %15 = vector.multi_reduction <add>, %14, %cst_9 [1] : vector<17x32xf32> to vector<17xf32>
    %16 = vector.shape_cast %15 : vector<17xf32> to vector<17x1xf32>
    %cst_10 = arith.constant 3.200000e+01 : f32
    %17 = vector.broadcast %cst_10 : f32 to vector<17x1xf32>
    %18 = arith.divf %16, %17 : vector<17x1xf32>
    %cst_11 = arith.constant 9.99999997E-7 : f32
    %19 = vector.broadcast %cst_11 : f32 to vector<17x1xf32>
    %20 = arith.addf %18, %19 : vector<17x1xf32>
    %21 = math.rsqrt %20 : vector<17x1xf32>
    %22 = vector.broadcast %21 : vector<17x1xf32> to vector<17x32xf32>
    %23 = arith.mulf %13, %22 : vector<17x32xf32>
    %24 = vector.broadcast %5 : vector<1x32xf32> to vector<17x32xf32>
    %25 = arith.mulf %23, %24 : vector<17x32xf32>
    %26 = vector.broadcast %7 : vector<1x32xf32> to vector<17x32xf32>
    %27 = arith.addf %25, %26 : vector<17x32xf32>
    %28 = arith.truncf %27 : vector<17x32xf32> to vector<17x32xbf16>
    %c0_12 = arith.constant 0 : index
    %c0_13 = arith.constant 0 : index
    %c0_14 = arith.constant 0 : index
    %29 = vector.load %arg7[%c0_12, %c0_13, %c0_14] : memref<1x32x96xbf16, #tpu.memory_space<vmem>>, vector<1x32x96xbf16>
    %30 = vector.shape_cast %29 : vector<1x32x96xbf16> to vector<32x96xbf16>
    %cst_15 = arith.constant dense<0.000000e+00> : vector<17x96xf32>
    %31 = tpu.matmul %28, %30, %cst_15 {dimension_numbers = #tpu.dot_dimension_numbers<[1], [0], [0], [1], [0, 0, 1, 1], [], []>} : vector<17x32xbf16>, vector<32x96xbf16>, vector<17x96xf32> -> vector<17x96xf32>
    %c0_16 = arith.constant 0 : index
    %c0_17 = arith.constant 0 : index
    %c0_18 = arith.constant 0 : index
    %32 = vector.load %arg8[%c0_16, %c0_17, %c0_18] : memref<1x1x96xf32, #tpu.memory_space<vmem>>, vector<1x1x96xf32>
    %33 = vector.shape_cast %32 : vector<1x1x96xf32> to vector<1x96xf32>
    %34 = vector.broadcast %33 : vector<1x96xf32> to vector<17x96xf32>
    %35 = arith.addf %31, %34 : vector<17x96xf32>
    %36 = vector.extract_strided_slice %35 {offsets = [0, 0], sizes = [17, 32], strides = [1, 1]} : vector<17x96xf32> to vector<17x32xf32>
    %cst_19 = arith.constant 0.353553385 : f32
    %37 = vector.broadcast %cst_19 : f32 to vector<17x32xf32>
    %38 = arith.mulf %36, %37 : vector<17x32xf32>
    %39 = arith.truncf %38 : vector<17x32xf32> to vector<17x32xbf16>
    %40 = vector.extract_strided_slice %35 {offsets = [0, 32], sizes = [17, 32], strides = [1, 1]} : vector<17x96xf32> to vector<17x32xf32>
    %41 = arith.truncf %40 : vector<17x32xf32> to vector<17x32xbf16>
    %42 = vector.extract_strided_slice %35 {offsets = [0, 64], sizes = [17, 32], strides = [1, 1]} : vector<17x96xf32> to vector<17x32xf32>
    %43 = arith.truncf %42 : vector<17x32xf32> to vector<17x32xbf16>
    %44 = vector.extract_strided_slice %39 {offsets = [0, 0], sizes = [17, 8], strides = [1, 1]} : vector<17x32xbf16> to vector<17x8xbf16>
    %45 = vector.extract_strided_slice %41 {offsets = [0, 0], sizes = [17, 8], strides = [1, 1]} : vector<17x32xbf16> to vector<17x8xbf16>
    %46 = vector.extract_strided_slice %43 {offsets = [0, 0], sizes = [17, 8], strides = [1, 1]} : vector<17x32xbf16> to vector<17x8xbf16>
    %cst_20 = arith.constant dense<0.000000e+00> : vector<17x17xf32>
    %47 = tpu.matmul %44, %45, %cst_20 {dimension_numbers = #tpu.dot_dimension_numbers<[1], [1], [0], [0], [0, 0, 1, 0], [], []>} : vector<17x8xbf16>, vector<17x8xbf16>, vector<17x17xf32> -> vector<17x17xf32>
    %cst_21 = arith.constant dense<0xFF800000> : vector<17xf32>
    %48 = vector.multi_reduction <maximumf>, %47, %cst_21 [1] : vector<17x17xf32> to vector<17xf32>
    %49 = vector.shape_cast %48 : vector<17xf32> to vector<17x1xf32>
    %50 = vector.broadcast %49 : vector<17x1xf32> to vector<17x17xf32>
    %51 = arith.subf %47, %50 : vector<17x17xf32>
    %52 = math.exp %51 : vector<17x17xf32>
    %cst_22 = arith.constant dense<0.000000e+00> : vector<17xf32>
    %53 = vector.multi_reduction <add>, %52, %cst_22 [1] : vector<17x17xf32> to vector<17xf32>
    %54 = vector.shape_cast %53 : vector<17xf32> to vector<17x1xf32>
    %55 = tpu.reciprocal %54 {approx = true} : vector<17x1xf32> -> vector<17x1xf32>
    %56 = vector.broadcast %55 : vector<17x1xf32> to vector<17x17xf32>
    %57 = arith.mulf %52, %56 : vector<17x17xf32>
    %58 = arith.truncf %57 : vector<17x17xf32> to vector<17x17xbf16>
    %cst_23 = arith.constant dense<0.000000e+00> : vector<17x8xf32>
    %59 = tpu.matmul %58, %46, %cst_23 {dimension_numbers = #tpu.dot_dimension_numbers<[1], [0], [0], [1], [0, 0, 1, 1], [], []>} : vector<17x17xbf16>, vector<17x8xbf16>, vector<17x8xf32> -> vector<17x8xf32>
    %c0_24 = arith.constant 0 : index
    %c0_25 = arith.constant 0 : index
    %60 = vector.load %arg21[%c0_24, %c0_25] : memref<17x32xf32, #tpu.memory_space<vmem>>, vector<17x8xf32>
    tpu.vector_store %arg21[%c0_24, %c0_25], %59 {strides = array<i32>} : memref<17x32xf32, #tpu.memory_space<vmem>>, vector<17x8xf32>,
    %61 = vector.extract_strided_slice %39 {offsets = [0, 8], sizes = [17, 8], strides = [1, 1]} : vector<17x32xbf16> to vector<17x8xbf16>
    %62 = vector.extract_strided_slice %41 {offsets = [0, 8], sizes = [17, 8], strides = [1, 1]} : vector<17x32xbf16> to vector<17x8xbf16>
    %63 = vector.extract_strided_slice %43 {offsets = [0, 8], sizes = [17, 8], strides = [1, 1]} : vector<17x32xbf16> to vector<17x8xbf16>
    %cst_26 = arith.constant dense<0.000000e+00> : vector<17x17xf32>
    %64 = tpu.matmul %61, %62, %cst_26 {dimension_numbers = #tpu.dot_dimension_numbers<[1], [1], [0], [0], [0, 0, 1, 0], [], []>} : vector<17x8xbf16>, vector<17x8xbf16>, vector<17x17xf32> -> vector<17x17xf32>
    %cst_27 = arith.constant dense<0xFF800000> : vector<17xf32>
    %65 = vector.multi_reduction <maximumf>, %64, %cst_27 [1] : vector<17x17xf32> to vector<17xf32>
    %66 = vector.shape_cast %65 : vector<17xf32> to vector<17x1xf32>
    %67 = vector.broadcast %66 : vector<17x1xf32> to vector<17x17xf32>
    %68 = arith.subf %64, %67 : vector<17x17xf32>
    %69 = math.exp %68 : vector<17x17xf32>
    %cst_28 = arith.constant dense<0.000000e+00> : vector<17xf32>
    %70 = vector.multi_reduction <add>, %69, %cst_28 [1] : vector<17x17xf32> to vector<17xf32>
    %71 = vector.shape_cast %70 : vector<17xf32> to vector<17x1xf32>
    %72 = tpu.reciprocal %71 {approx = true} : vector<17x1xf32> -> vector<17x1xf32>
    %73 = vector.broadcast %72 : vector<17x1xf32> to vector<17x17xf32>
    %74 = arith.mulf %69, %73 : vector<17x17xf32>
    %75 = arith.truncf %74 : vector<17x17xf32> to vector<17x17xbf16>
    %cst_29 = arith.constant dense<0.000000e+00> : vector<17x8xf32>
    %76 = tpu.matmul %75, %63, %cst_29 {dimension_numbers = #tpu.dot_dimension_numbers<[1], [0], [0], [1], [0, 0, 1, 1], [], []>} : vector<17x17xbf16>, vector<17x8xbf16>, vector<17x8xf32> -> vector<17x8xf32>
    %c0_30 = arith.constant 0 : index
    %c8 = arith.constant 8 : index
    %77 = vector.load %arg21[%c0_30, %c8] : memref<17x32xf32, #tpu.memory_space<vmem>>, vector<17x8xf32>
    tpu.vector_store %arg21[%c0_30, %c8], %76 {strides = array<i32>} : memref<17x32xf32, #tpu.memory_space<vmem>>, vector<17x8xf32>,
    %78 = vector.extract_strided_slice %39 {offsets = [0, 16], sizes = [17, 8], strides = [1, 1]} : vector<17x32xbf16> to vector<17x8xbf16>
    %79 = vector.extract_strided_slice %41 {offsets = [0, 16], sizes = [17, 8], strides = [1, 1]} : vector<17x32xbf16> to vector<17x8xbf16>
    %80 = vector.extract_strided_slice %43 {offsets = [0, 16], sizes = [17, 8], strides = [1, 1]} : vector<17x32xbf16> to vector<17x8xbf16>
    %cst_31 = arith.constant dense<0.000000e+00> : vector<17x17xf32>
    %81 = tpu.matmul %78, %79, %cst_31 {dimension_numbers = #tpu.dot_dimension_numbers<[1], [1], [0], [0], [0, 0, 1, 0], [], []>} : vector<17x8xbf16>, vector<17x8xbf16>, vector<17x17xf32> -> vector<17x17xf32>
    %cst_32 = arith.constant dense<0xFF800000> : vector<17xf32>
    %82 = vector.multi_reduction <maximumf>, %81, %cst_32 [1] : vector<17x17xf32> to vector<17xf32>
    %83 = vector.shape_cast %82 : vector<17xf32> to vector<17x1xf32>
    %84 = vector.broadcast %83 : vector<17x1xf32> to vector<17x17xf32>
    %85 = arith.subf %81, %84 : vector<17x17xf32>
    %86 = math.exp %85 : vector<17x17xf32>
    %cst_33 = arith.constant dense<0.000000e+00> : vector<17xf32>
    %87 = vector.multi_reduction <add>, %86, %cst_33 [1] : vector<17x17xf32> to vector<17xf32>
    %88 = vector.shape_cast %87 : vector<17xf32> to vector<17x1xf32>
    %89 = tpu.reciprocal %88 {approx = true} : vector<17x1xf32> -> vector<17x1xf32>
    %90 = vector.broadcast %89 : vector<17x1xf32> to vector<17x17xf32>
    %91 = arith.mulf %86, %90 : vector<17x17xf32>
    %92 = arith.truncf %91 : vector<17x17xf32> to vector<17x17xbf16>
    %cst_34 = arith.constant dense<0.000000e+00> : vector<17x8xf32>
    %93 = tpu.matmul %92, %80, %cst_34 {dimension_numbers = #tpu.dot_dimension_numbers<[1], [0], [0], [1], [0, 0, 1, 1], [], []>} : vector<17x17xbf16>, vector<17x8xbf16>, vector<17x8xf32> -> vector<17x8xf32>
    %c0_35 = arith.constant 0 : index
    %c16 = arith.constant 16 : index
    %94 = vector.load %arg21[%c0_35, %c16] : memref<17x32xf32, #tpu.memory_space<vmem>>, vector<17x8xf32>
    tpu.vector_store %arg21[%c0_35, %c16], %93 {strides = array<i32>} : memref<17x32xf32, #tpu.memory_space<vmem>>, vector<17x8xf32>,
    %95 = vector.extract_strided_slice %39 {offsets = [0, 24], sizes = [17, 8], strides = [1, 1]} : vector<17x32xbf16> to vector<17x8xbf16>
    %96 = vector.extract_strided_slice %41 {offsets = [0, 24], sizes = [17, 8], strides = [1, 1]} : vector<17x32xbf16> to vector<17x8xbf16>
    %97 = vector.extract_strided_slice %43 {offsets = [0, 24], sizes = [17, 8], strides = [1, 1]} : vector<17x32xbf16> to vector<17x8xbf16>
    %cst_36 = arith.constant dense<0.000000e+00> : vector<17x17xf32>
    %98 = tpu.matmul %95, %96, %cst_36 {dimension_numbers = #tpu.dot_dimension_numbers<[1], [1], [0], [0], [0, 0, 1, 0], [], []>} : vector<17x8xbf16>, vector<17x8xbf16>, vector<17x17xf32> -> vector<17x17xf32>
    %cst_37 = arith.constant dense<0xFF800000> : vector<17xf32>
    %99 = vector.multi_reduction <maximumf>, %98, %cst_37 [1] : vector<17x17xf32> to vector<17xf32>
    %100 = vector.shape_cast %99 : vector<17xf32> to vector<17x1xf32>
    %101 = vector.broadcast %100 : vector<17x1xf32> to vector<17x17xf32>
    %102 = arith.subf %98, %101 : vector<17x17xf32>
    %103 = math.exp %102 : vector<17x17xf32>
    %cst_38 = arith.constant dense<0.000000e+00> : vector<17xf32>
    %104 = vector.multi_reduction <add>, %103, %cst_38 [1] : vector<17x17xf32> to vector<17xf32>
    %105 = vector.shape_cast %104 : vector<17xf32> to vector<17x1xf32>
    %106 = tpu.reciprocal %105 {approx = true} : vector<17x1xf32> -> vector<17x1xf32>
    %107 = vector.broadcast %106 : vector<17x1xf32> to vector<17x17xf32>
    %108 = arith.mulf %103, %107 : vector<17x17xf32>
    %109 = arith.truncf %108 : vector<17x17xf32> to vector<17x17xbf16>
    %cst_39 = arith.constant dense<0.000000e+00> : vector<17x8xf32>
    %110 = tpu.matmul %109, %97, %cst_39 {dimension_numbers = #tpu.dot_dimension_numbers<[1], [0], [0], [1], [0, 0, 1, 1], [], []>} : vector<17x17xbf16>, vector<17x8xbf16>, vector<17x8xf32> -> vector<17x8xf32>
    %c0_40 = arith.constant 0 : index
    %c24 = arith.constant 24 : index
    %111 = vector.load %arg21[%c0_40, %c24] : memref<17x32xf32, #tpu.memory_space<vmem>>, vector<17x8xf32>
    tpu.vector_store %arg21[%c0_40, %c24], %110 {strides = array<i32>} : memref<17x32xf32, #tpu.memory_space<vmem>>, vector<17x8xf32>,
    %c0_41 = arith.constant 0 : index
    %c0_42 = arith.constant 0 : index
    %112 = vector.load %arg21[%c0_41, %c0_42] : memref<17x32xf32, #tpu.memory_space<vmem>>, vector<17x32xf32>
    %113 = arith.truncf %112 : vector<17x32xf32> to vector<17x32xbf16>
    %c0_43 = arith.constant 0 : index
    %c0_44 = arith.constant 0 : index
    %c0_45 = arith.constant 0 : index
    %114 = vector.load %arg9[%c0_43, %c0_44, %c0_45] : memref<1x32x32xbf16, #tpu.memory_space<vmem>>, vector<1x32x32xbf16>
    %115 = vector.shape_cast %114 : vector<1x32x32xbf16> to vector<32x32xbf16>
    %cst_46 = arith.constant dense<0.000000e+00> : vector<17x32xf32>
    %116 = tpu.matmul %113, %115, %cst_46 {dimension_numbers = #tpu.dot_dimension_numbers<[1], [0], [0], [1], [0, 0, 1, 1], [], []>} : vector<17x32xbf16>, vector<32x32xbf16>, vector<17x32xf32> -> vector<17x32xf32>
    %c0_47 = arith.constant 0 : index
    %c0_48 = arith.constant 0 : index
    %c0_49 = arith.constant 0 : index
    %117 = vector.load %arg10[%c0_47, %c0_48, %c0_49] : memref<1x1x32xf32, #tpu.memory_space<vmem>>, vector<1x1x32xf32>
    %118 = vector.shape_cast %117 : vector<1x1x32xf32> to vector<1x32xf32>
    %119 = vector.broadcast %118 : vector<1x32xf32> to vector<17x32xf32>
    %120 = arith.addf %116, %119 : vector<17x32xf32>
    %121 = arith.addf %3, %120 : vector<17x32xf32>
    %c0_50 = arith.constant 0 : index
    %c0_51 = arith.constant 0 : index
    %c0_52 = arith.constant 0 : index
    %122 = vector.load %arg11[%c0_50, %c0_51, %c0_52] : memref<1x1x32xf32, #tpu.memory_space<vmem>>, vector<1x1x32xf32>
    %123 = vector.shape_cast %122 : vector<1x1x32xf32> to vector<1x32xf32>
    %c0_53 = arith.constant 0 : index
    %c0_54 = arith.constant 0 : index
    %c0_55 = arith.constant 0 : index
    %124 = vector.load %arg12[%c0_53, %c0_54, %c0_55] : memref<1x1x32xf32, #tpu.memory_space<vmem>>, vector<1x1x32xf32>
    %125 = vector.shape_cast %124 : vector<1x1x32xf32> to vector<1x32xf32>
    %cst_56 = arith.constant dense<0.000000e+00> : vector<17xf32>
    %126 = vector.multi_reduction <add>, %121, %cst_56 [1] : vector<17x32xf32> to vector<17xf32>
    %127 = vector.shape_cast %126 : vector<17xf32> to vector<17x1xf32>
    %cst_57 = arith.constant 3.200000e+01 : f32
    %128 = vector.broadcast %cst_57 : f32 to vector<17x1xf32>
    %129 = arith.divf %127, %128 : vector<17x1xf32>
    %130 = vector.broadcast %129 : vector<17x1xf32> to vector<17x32xf32>
    %131 = arith.subf %121, %130 : vector<17x32xf32>
    %132 = arith.mulf %131, %131 : vector<17x32xf32>
    %cst_58 = arith.constant dense<0.000000e+00> : vector<17xf32>
    %133 = vector.multi_reduction <add>, %132, %cst_58 [1] : vector<17x32xf32> to vector<17xf32>
    %134 = vector.shape_cast %133 : vector<17xf32> to vector<17x1xf32>
    %cst_59 = arith.constant 3.200000e+01 : f32
    %135 = vector.broadcast %cst_59 : f32 to vector<17x1xf32>
    %136 = arith.divf %134, %135 : vector<17x1xf32>
    %cst_60 = arith.constant 9.99999997E-7 : f32
    %137 = vector.broadcast %cst_60 : f32 to vector<17x1xf32>
    %138 = arith.addf %136, %137 : vector<17x1xf32>
    %139 = math.rsqrt %138 : vector<17x1xf32>
    %140 = vector.broadcast %139 : vector<17x1xf32> to vector<17x32xf32>
    %141 = arith.mulf %131, %140 : vector<17x32xf32>
    %142 = vector.broadcast %123 : vector<1x32xf32> to vector<17x32xf32>
    %143 = arith.mulf %141, %142 : vector<17x32xf32>
    %144 = vector.broadcast %125 : vector<1x32xf32> to vector<17x32xf32>
    %145 = arith.addf %143, %144 : vector<17x32xf32>
    %146 = arith.truncf %145 : vector<17x32xf32> to vector<17x32xbf16>
    %c0_61 = arith.constant 0 : index
    %c0_62 = arith.constant 0 : index
    %c0_63 = arith.constant 0 : index
    %147 = vector.load %arg13[%c0_61, %c0_62, %c0_63] : memref<1x32x128xbf16, #tpu.memory_space<vmem>>, vector<1x32x128xbf16>
    %148 = vector.shape_cast %147 : vector<1x32x128xbf16> to vector<32x128xbf16>
    %cst_64 = arith.constant dense<0.000000e+00> : vector<17x128xf32>
    %149 = tpu.matmul %146, %148, %cst_64 {dimension_numbers = #tpu.dot_dimension_numbers<[1], [0], [0], [1], [0, 0, 1, 1], [], []>} : vector<17x32xbf16>, vector<32x128xbf16>, vector<17x128xf32> -> vector<17x128xf32>
    %c0_65 = arith.constant 0 : index
    %c0_66 = arith.constant 0 : index
    %c0_67 = arith.constant 0 : index
    %150 = vector.load %arg14[%c0_65, %c0_66, %c0_67] : memref<1x1x128xf32, #tpu.memory_space<vmem>>, vector<1x1x128xf32>
    %151 = vector.shape_cast %150 : vector<1x1x128xf32> to vector<1x128xf32>
    %152 = vector.broadcast %151 : vector<1x128xf32> to vector<17x128xf32>
    %153 = arith.addf %149, %152 : vector<17x128xf32>
    %cst_68 = arith.constant 5.000000e-01 : f32
    %154 = vector.broadcast %cst_68 : f32 to vector<17x128xf32>
    %155 = arith.mulf %154, %153 : vector<17x128xf32>
    %cst_69 = arith.constant 0.707106769 : f32
    %156 = vector.broadcast %cst_69 : f32 to vector<17x128xf32>
    %157 = arith.mulf %153, %156 : vector<17x128xf32>
    %cst_70 = arith.constant 0.000000e+00 : f32
    %158 = vector.broadcast %cst_70 : f32 to vector<17x128xf32>
    %159 = arith.cmpf oge, %157, %158 : vector<17x128xf32>
    %cst_71 = arith.constant 1.000000e+00 : f32
    %cst_72 = arith.constant -1.000000e+00 : f32
    %160 = vector.broadcast %cst_71 : f32 to vector<17x128xf32>
    %161 = vector.broadcast %cst_72 : f32 to vector<17x128xf32>
    %162 = arith.select %159, %160, %161 : vector<17x128xi1>, vector<17x128xf32>
    %163 = math.absf %157 : vector<17x128xf32>
    %cst_73 = arith.constant 0.327591091 : f32
    %164 = vector.broadcast %cst_73 : f32 to vector<17x128xf32>
    %165 = arith.mulf %164, %163 : vector<17x128xf32>
    %cst_74 = arith.constant 1.000000e+00 : f32
    %166 = vector.broadcast %cst_74 : f32 to vector<17x128xf32>
    %167 = arith.addf %166, %165 : vector<17x128xf32>
    %cst_75 = arith.constant 1.000000e+00 : f32
    %168 = vector.broadcast %cst_75 : f32 to vector<17x128xf32>
    %169 = arith.divf %168, %167 : vector<17x128xf32>
    %cst_76 = arith.constant 1.06140542 : f32
    %170 = vector.broadcast %cst_76 : f32 to vector<17x128xf32>
    %171 = arith.mulf %170, %169 : vector<17x128xf32>
    %cst_77 = arith.constant -1.45315206 : f32
    %172 = vector.broadcast %cst_77 : f32 to vector<17x128xf32>
    %173 = arith.addf %171, %172 : vector<17x128xf32>
    %174 = arith.mulf %173, %169 : vector<17x128xf32>
    %cst_78 = arith.constant 1.42141378 : f32
    %175 = vector.broadcast %cst_78 : f32 to vector<17x128xf32>
    %176 = arith.addf %174, %175 : vector<17x128xf32>
    %177 = arith.mulf %176, %169 : vector<17x128xf32>
    %cst_79 = arith.constant -0.284496725 : f32
    %178 = vector.broadcast %cst_79 : f32 to vector<17x128xf32>
    %179 = arith.addf %177, %178 : vector<17x128xf32>
    %180 = arith.mulf %179, %169 : vector<17x128xf32>
    %cst_80 = arith.constant 0.254829586 : f32
    %181 = vector.broadcast %cst_80 : f32 to vector<17x128xf32>
    %182 = arith.addf %180, %181 : vector<17x128xf32>
    %183 = arith.mulf %182, %169 : vector<17x128xf32>
    %cst_81 = arith.constant 0.000000e+00 : f32
    %184 = vector.broadcast %cst_81 : f32 to vector<17x128xf32>
    %185 = arith.subf %184, %163 : vector<17x128xf32>
    %186 = arith.mulf %185, %163 : vector<17x128xf32>
    %187 = math.exp %186 : vector<17x128xf32>
    %188 = arith.mulf %183, %187 : vector<17x128xf32>
    %cst_82 = arith.constant 1.000000e+00 : f32
    %189 = vector.broadcast %cst_82 : f32 to vector<17x128xf32>
    %190 = arith.subf %189, %188 : vector<17x128xf32>
    %191 = arith.mulf %162, %190 : vector<17x128xf32>
    %cst_83 = arith.constant 1.000000e+00 : f32
    %192 = vector.broadcast %cst_83 : f32 to vector<17x128xf32>
    %193 = arith.addf %192, %191 : vector<17x128xf32>
    %194 = arith.mulf %155, %193 : vector<17x128xf32>
    %195 = arith.truncf %194 : vector<17x128xf32> to vector<17x128xbf16>
    %c0_84 = arith.constant 0 : index
    %c0_85 = arith.constant 0 : index
    %c0_86 = arith.constant 0 : index
    %196 = vector.load %arg15[%c0_84, %c0_85, %c0_86] : memref<1x128x32xbf16, #tpu.memory_space<vmem>>, vector<1x128x32xbf16>
    %197 = vector.shape_cast %196 : vector<1x128x32xbf16> to vector<128x32xbf16>
    %cst_87 = arith.constant dense<0.000000e+00> : vector<17x32xf32>
    %198 = tpu.matmul %195, %197, %cst_87 {dimension_numbers = #tpu.dot_dimension_numbers<[1], [0], [0], [1], [0, 0, 1, 1], [], []>} : vector<17x128xbf16>, vector<128x32xbf16>, vector<17x32xf32> -> vector<17x32xf32>
    %c0_88 = arith.constant 0 : index
    %c0_89 = arith.constant 0 : index
    %c0_90 = arith.constant 0 : index
    %199 = vector.load %arg16[%c0_88, %c0_89, %c0_90] : memref<1x1x32xf32, #tpu.memory_space<vmem>>, vector<1x1x32xf32>
    %200 = vector.shape_cast %199 : vector<1x1x32xf32> to vector<1x32xf32>
    %201 = vector.broadcast %200 : vector<1x32xf32> to vector<17x32xf32>
    %202 = arith.addf %198, %201 : vector<17x32xf32>
    %203 = arith.addf %121, %202 : vector<17x32xf32>
    %c0_91 = arith.constant 0 : index
    %c0_92 = arith.constant 0 : index
    %204 = vector.load %arg20[%c0_91, %c0_92] : memref<17x32xf32, #tpu.memory_space<vmem>>, vector<17x32xf32>
    tpu.vector_store %arg20[%c0_91, %c0_92], %203 {strides = array<i32>} : memref<17x32xf32, #tpu.memory_space<vmem>>, vector<17x32xf32>,
    %c1_i32 = arith.constant 1 : i32
    %205 = arith.cmpi eq, %arg1, %c1_i32 : i32
    %206 = arith.extui %205 : i1 to i32
    %c0_i32_93 = arith.constant 0 : i32
    %207 = arith.cmpi ne, %206, %c0_i32_93 : i32
    scf.if %207 {
      %c0_94 = arith.constant 0 : index
      %c0_95 = arith.constant 0 : index
      %208 = vector.load %arg17[%c0_94, %c0_95] : memref<1x32xf32, #tpu.memory_space<vmem>>, vector<1x32xf32>
      %c0_96 = arith.constant 0 : index
      %c0_97 = arith.constant 0 : index
      %209 = vector.load %arg18[%c0_96, %c0_97] : memref<1x32xf32, #tpu.memory_space<vmem>>, vector<1x32xf32>
      %cst_98 = arith.constant dense<0.000000e+00> : vector<17xf32>
      %210 = vector.multi_reduction <add>, %203, %cst_98 [1] : vector<17x32xf32> to vector<17xf32>
      %211 = vector.shape_cast %210 : vector<17xf32> to vector<17x1xf32>
      %cst_99 = arith.constant 3.200000e+01 : f32
      %212 = vector.broadcast %cst_99 : f32 to vector<17x1xf32>
      %213 = arith.divf %211, %212 : vector<17x1xf32>
      %214 = vector.broadcast %213 : vector<17x1xf32> to vector<17x32xf32>
      %215 = arith.subf %203, %214 : vector<17x32xf32>
      %216 = arith.mulf %215, %215 : vector<17x32xf32>
      %cst_100 = arith.constant dense<0.000000e+00> : vector<17xf32>
      %217 = vector.multi_reduction <add>, %216, %cst_100 [1] : vector<17x32xf32> to vector<17xf32>
      %218 = vector.shape_cast %217 : vector<17xf32> to vector<17x1xf32>
      %cst_101 = arith.constant 3.200000e+01 : f32
      %219 = vector.broadcast %cst_101 : f32 to vector<17x1xf32>
      %220 = arith.divf %218, %219 : vector<17x1xf32>
      %cst_102 = arith.constant 9.99999997E-7 : f32
      %221 = vector.broadcast %cst_102 : f32 to vector<17x1xf32>
      %222 = arith.addf %220, %221 : vector<17x1xf32>
      %223 = math.rsqrt %222 : vector<17x1xf32>
      %224 = vector.broadcast %223 : vector<17x1xf32> to vector<17x32xf32>
      %225 = arith.mulf %215, %224 : vector<17x32xf32>
      %226 = vector.broadcast %208 : vector<1x32xf32> to vector<17x32xf32>
      %227 = arith.mulf %225, %226 : vector<17x32xf32>
      %228 = vector.broadcast %209 : vector<1x32xf32> to vector<17x32xf32>
      %229 = arith.addf %227, %228 : vector<17x32xf32>
      %c0_103 = arith.constant 0 : index
      %c0_104 = arith.constant 0 : index
      %c0_105 = arith.constant 0 : index
      %230 = vector.load %arg19[%c0_103, %c0_104, %c0_105] : memref<1x17x32xf32, #tpu.memory_space<vmem>>, vector<1x17x32xf32>
      %231 = vector.shape_cast %230 : vector<1x17x32xf32> to vector<17x32xf32>
      %232 = vector.shape_cast %229 : vector<17x32xf32> to vector<1x17x32xf32>
      tpu.vector_store %arg19[%c0_103, %c0_104, %c0_105], %232 {strides = array<i32>} : memref<1x17x32xf32, #tpu.memory_space<vmem>>, vector<1x17x32xf32>,
    } else {
    }
    return
  }
  func.func @transform_0(%arg0: i32, %arg1: i32) -> (i32, i32, i32) {
    %c0_i32 = arith.constant 0 : i32
    %c0_i32_0 = arith.constant 0 : i32
    %c0_i32_1 = arith.constant 0 : i32
    return %arg0, %c0_i32, %c0_i32_0 : i32, i32, i32
  }
  func.func @transform_1(%arg0: i32, %arg1: i32) -> (i32, i32) {
    %c0_i32 = arith.constant 0 : i32
    %c0_i32_0 = arith.constant 0 : i32
    %c0_i32_1 = arith.constant 0 : i32
    return %c0_i32, %c0_i32_0 : i32, i32
  }
  func.func @transform_2(%arg0: i32, %arg1: i32) -> (i32, i32) {
    %c0_i32 = arith.constant 0 : i32
    %c0_i32_0 = arith.constant 0 : i32
    %c0_i32_1 = arith.constant 0 : i32
    return %c0_i32, %c0_i32_0 : i32, i32
  }
  func.func @transform_3(%arg0: i32, %arg1: i32) -> (i32, i32, i32) {
    %c0_i32 = arith.constant 0 : i32
    %c0_i32_0 = arith.constant 0 : i32
    %c0_i32_1 = arith.constant 0 : i32
    return %arg1, %c0_i32, %c0_i32_0 : i32, i32, i32
  }
  func.func @transform_4(%arg0: i32, %arg1: i32) -> (i32, i32, i32) {
    %c0_i32 = arith.constant 0 : i32
    %c0_i32_0 = arith.constant 0 : i32
    %c0_i32_1 = arith.constant 0 : i32
    return %arg1, %c0_i32, %c0_i32_0 : i32, i32, i32
  }
  func.func @transform_5(%arg0: i32, %arg1: i32) -> (i32, i32, i32) {
    %c0_i32 = arith.constant 0 : i32
    %c0_i32_0 = arith.constant 0 : i32
    %c0_i32_1 = arith.constant 0 : i32
    return %arg1, %c0_i32, %c0_i32_0 : i32, i32, i32
  }
  func.func @transform_6(%arg0: i32, %arg1: i32) -> (i32, i32, i32) {
    %c0_i32 = arith.constant 0 : i32
    %c0_i32_0 = arith.constant 0 : i32
    %c0_i32_1 = arith.constant 0 : i32
    return %arg1, %c0_i32, %c0_i32_0 : i32, i32, i32
  }
  func.func @transform_7(%arg0: i32, %arg1: i32) -> (i32, i32, i32) {
    %c0_i32 = arith.constant 0 : i32
    %c0_i32_0 = arith.constant 0 : i32
    %c0_i32_1 = arith.constant 0 : i32
    return %arg1, %c0_i32, %c0_i32_0 : i32, i32, i32
  }
  func.func @transform_8(%arg0: i32, %arg1: i32) -> (i32, i32, i32) {
    %c0_i32 = arith.constant 0 : i32
    %c0_i32_0 = arith.constant 0 : i32
    %c0_i32_1 = arith.constant 0 : i32
    return %arg1, %c0_i32, %c0_i32_0 : i32, i32, i32
  }
  func.func @transform_9(%arg0: i32, %arg1: i32) -> (i32, i32, i32) {
    %c0_i32 = arith.constant 0 : i32
    %c0_i32_0 = arith.constant 0 : i32
    %c0_i32_1 = arith.constant 0 : i32
    return %arg1, %c0_i32, %c0_i32_0 : i32, i32, i32
  }
  func.func @transform_10(%arg0: i32, %arg1: i32) -> (i32, i32, i32) {
    %c0_i32 = arith.constant 0 : i32
    %c0_i32_0 = arith.constant 0 : i32
    %c0_i32_1 = arith.constant 0 : i32
    return %arg1, %c0_i32, %c0_i32_0 : i32, i32, i32
  }
  func.func @transform_11(%arg0: i32, %arg1: i32) -> (i32, i32, i32) {
    %c0_i32 = arith.constant 0 : i32
    %c0_i32_0 = arith.constant 0 : i32
    %c0_i32_1 = arith.constant 0 : i32
    return %arg1, %c0_i32, %c0_i32_0 : i32, i32, i32
  }
  func.func @transform_12(%arg0: i32, %arg1: i32) -> (i32, i32, i32) {
    %c0_i32 = arith.constant 0 : i32
    %c0_i32_0 = arith.constant 0 : i32
    %c0_i32_1 = arith.constant 0 : i32
    return %arg1, %c0_i32, %c0_i32_0 : i32, i32, i32
  }
  func.func @transform_13(%arg0: i32, %arg1: i32) -> (i32, i32, i32) {
    %c0_i32 = arith.constant 0 : i32
    %c0_i32_0 = arith.constant 0 : i32
    %c0_i32_1 = arith.constant 0 : i32
    return %arg1, %c0_i32, %c0_i32_0 : i32, i32, i32
  }
  func.func @transform_14(%arg0: i32, %arg1: i32) -> (i32, i32, i32) {
    %c0_i32 = arith.constant 0 : i32
    %c0_i32_0 = arith.constant 0 : i32
    %c0_i32_1 = arith.constant 0 : i32
    return %arg1, %c0_i32, %c0_i32_0 : i32, i32, i32
  }
  func.func @transform_15(%arg0: i32, %arg1: i32) -> (i32, i32) {
    %c0_i32 = arith.constant 0 : i32
    %c0_i32_0 = arith.constant 0 : i32
    %c0_i32_1 = arith.constant 0 : i32
    return %c0_i32, %c0_i32_0 : i32, i32
  }
  func.func @transform_16(%arg0: i32, %arg1: i32) -> (i32, i32) {
    %c0_i32 = arith.constant 0 : i32
    %c0_i32_0 = arith.constant 0 : i32
    %c0_i32_1 = arith.constant 0 : i32
    return %c0_i32, %c0_i32_0 : i32, i32
  }
  func.func @transform_17(%arg0: i32, %arg1: i32) -> (i32, i32, i32) {
    %c0_i32 = arith.constant 0 : i32
    %c0_i32_0 = arith.constant 0 : i32
    %c0_i32_1 = arith.constant 0 : i32
    return %arg0, %c0_i32, %c0_i32_0 : i32, i32, i32
  }
}

</mosaic_0001>

<llo_original>
// kernel: vit_forward.1
$region0: #{vit_forward.1}
  #allocation0 [shape = 'u32[]', space=smem, size = 0x4, offset = 0x4, fixed_abs, tag = 'smem constant byte address 0x4 - core index']
  #allocation1 [shape = 'u32[144,128]{1,0:T(1,128)}', space=vmem, size = 0x12000, scoped, tag = 'internal scratch']
  #allocation2 [shape = 'f32[17,32]{1,0:T(8,128)}', space=vmem, size = 0x3000, scoped, tag = 'scratch operand']
  #allocation3 [shape = 'f32[17,32]{1,0:T(8,128)}', space=vmem, size = 0x3000, scoped, tag = 'scratch operand']
  %s0 = inlined_call_operand.vmem [shape: bf16[2,17,64], index: 0, kind: input, shape index: {}]
  %s1 = inlined_call_operand.vmem [shape: bf16[64,32], index: 1, kind: input, shape index: {}]
  %s2 = inlined_call_operand.vmem [shape: f32[17,32], index: 2, kind: input, shape index: {}]
  %s3 = inlined_call_operand.vmem [shape: f32[2,1,32], index: 3, kind: input, shape index: {}]
  %s4 = inlined_call_operand.vmem [shape: f32[2,1,32], index: 4, kind: input, shape index: {}]
  %s5 = inlined_call_operand.vmem [shape: bf16[2,32,96], index: 5, kind: input, shape index: {}]
  %s6 = inlined_call_operand.vmem [shape: f32[2,1,96], index: 6, kind: input, shape index: {}]
  %s7 = inlined_call_operand.vmem [shape: bf16[2,32,32], index: 7, kind: input, shape index: {}]
  %s8 = inlined_call_operand.vmem [shape: f32[2,1,32], index: 8, kind: input, shape index: {}]
  %s9 = inlined_call_operand.vmem [shape: f32[2,1,32], index: 9, kind: input, shape index: {}]
  %s10 = inlined_call_operand.vmem [shape: f32[2,1,32], index: 10, kind: input, shape index: {}]
  %s11 = inlined_call_operand.vmem [shape: bf16[2,32,128], index: 11, kind: input, shape index: {}]
  %s12 = inlined_call_operand.vmem [shape: f32[2,1,128], index: 12, kind: input, shape index: {}]
  %s13 = inlined_call_operand.vmem [shape: bf16[2,128,32], index: 13, kind: input, shape index: {}]
  %s14 = inlined_call_operand.vmem [shape: f32[2,1,32], index: 14, kind: input, shape index: {}]
  %s15 = inlined_call_operand.vmem [shape: f32[1,32], index: 15, kind: input, shape index: {}]
  %s16 = inlined_call_operand.vmem [shape: f32[1,32], index: 16, kind: input, shape index: {}]
  %s17 = inlined_call_operand.vmem [shape: f32[2,17,32], index: 17, kind: output, shape index: {}]
  %s18 = sld [smem:[#allocation0]]
  $region109: #{vit_forward.1} parent=0
    _
  %s20 = ssub.s32 1, %s18
  %s21 = scalar_select 0, %s20, %s18
  loop: start=0, step=1, limit=6
  $region2: #{vit_forward.1} parent=0 // loop_pre_header
    _
  $region3: #{vit_forward.1} parent=0 // loop_header
    %s23 = sphi 0, %s27
    %p24 = scmp.ge.s32.totalorder %s23, 6
    %s30 = sphi 0, %s42
    %s31 = sphi 0, %s38
    %s32 = sphi 0, %s30
    %s33 = sphi 0, %s31
    %s34 = sphi 0, %s32
    %s35 = sphi 0, %s33
    %s45 = sphi 0, %s47
    %s48 = sphi 0, %s45
    %s49 = sphi 0, %s48
    %s65 = sphi 0, %s49
    %s69 = sphi 0, %s69
    %s71 = sphi 0, %s69
    %s72 = sphi 0, %s71
    %s86 = sphi 0, %s72
    %s90 = sphi 0, %s90
    %s92 = sphi 0, %s90
    %s93 = sphi 0, %s92
    %s107 = sphi 0, %s93
    %s113 = sphi 0, %s115
    %s116 = sphi 0, %s113
    %s117 = sphi 0, %s116
    %s133 = sphi 0, %s117
    %s139 = sphi 0, %s141
    %s142 = sphi 0, %s139
    %s143 = sphi 0, %s142
    %s159 = sphi 0, %s143
    %s165 = sphi 0, %s167
    %s168 = sphi 0, %s165
    %s169 = sphi 0, %s168
    %s185 = sphi 0, %s169
    %s191 = sphi 0, %s193
    %s194 = sphi 0, %s191
    %s195 = sphi 0, %s194
    %s211 = sphi 0, %s195
    %s217 = sphi 0, %s219
    %s220 = sphi 0, %s217
    %s221 = sphi 0, %s220
    %s237 = sphi 0, %s221
    %s243 = sphi 0, %s245
    %s246 = sphi 0, %s243
    %s247 = sphi 0, %s246
    %s263 = sphi 0, %s247
    %s269 = sphi 0, %s271
    %s272 = sphi 0, %s269
    %s273 = sphi 0, %s272
    %s289 = sphi 0, %s273
    %s295 = sphi 0, %s297
    %s298 = sphi 0, %s295
    %s299 = sphi 0, %s298
    %s315 = sphi 0, %s299
    %s321 = sphi 0, %s323
    %s324 = sphi 0, %s321
    %s325 = sphi 0, %s324
    %s341 = sphi 0, %s325
    %s347 = sphi 0, %s349
    %s350 = sphi 0, %s347
    %s351 = sphi 0, %s350
    %s367 = sphi 0, %s351
    %s373 = sphi 0, %s375
    %s376 = sphi 0, %s373
    %s377 = sphi 0, %s376
    %s393 = sphi 0, %s377
    %s399 = sphi 0, %s401
    %s402 = sphi 0, %s399
    %s403 = sphi 0, %s402
    %s419 = sphi 0, %s403
    %s423 = sphi 0, %s423
    %s425 = sphi 0, %s423
    %s426 = sphi 0, %s425
    %s440 = sphi 0, %s426
    %s444 = sphi 0, %s444
    %s446 = sphi 0, %s444
    %s447 = sphi 0, %s446
    %s461 = sphi 0, %s447
    %s467 = sphi 0, %s469
    %s470 = sphi 0, %s467
    %s471 = sphi 0, %s470
    %s487 = sphi 0, %s471
  $region4: #{vit_forward.1} parent=0 // loop_header_branch
    %26 = sbr.rel (%p24) target = $region8
  $region5: #{vit_forward.1} parent=0 // loop_body
    %s28 = ssub.s32 %s23, 1
    %s29 = ssub.s32 %s23, 2
    %s36 = sadd.s32 1, %s31
    %p37 = scmp.ge.s32.totalorder %s36, 2
    %s38 = scalar_select %p37, 0, %s36
    %s39 = sadd.s32 1, %s30
    %s40 = scalar_select %p37, %s39, %s30
    %p41 = scmp.ge.s32.totalorder %s40, 2
    %s42 = scalar_select %p41, 0, %s40
    %s43 = ssub.s32 %s30, %s42
    %p44 = scmp.eq.s32.totalorder %s43, 0
    %s46 = sadd.s32 %s45, 1
    %s47 = scalar_select %p44, %s45, %s46
    %p50 = pneg %p44
    %p51 = scmp.eq.s32.totalorder %s23, 3
    %p52 = por %p50, %p51
    %p53 = scmp.ne.s32.totalorder %s45, %s48
    %p54 = scmp.eq.s32.totalorder %s23, 0
    %p55 = por %p53, %p54
    %p56 = scmp.ne.s32.totalorder %s45, %s48
    %p57 = scmp.eq.s32.totalorder %s28, 3
    %p58 = por %p56, %p57
    %p59 = scmp.ne.s32.totalorder %s48, %s49
    %p60 = scmp.eq.s32.totalorder %s28, 0
    %p61 = por %p59, %p60
    %p62 = scmp.ne.s32.totalorder %s48, %s49
    %p63 = scmp.eq.s32.totalorder %s29, 3
    %p64 = por %p62, %p63
    %p66 = scmp.ne.s32.totalorder %s49, %s65
    %p67 = scmp.eq.s32.totalorder %s29, 0
    %p68 = por %p66, %p67
    %s70 = sadd.s32 %s69, 1
    %p73 = scmp.eq.s32.totalorder %s23, 3
    %p74 = scmp.ne.s32.totalorder %s69, %s71
    %p75 = scmp.eq.s32.totalorder %s23, 0
    %p76 = por %p74, %p75
    %p77 = scmp.ne.s32.totalorder %s69, %s71
    %p78 = scmp.eq.s32.totalorder %s28, 3
    %p79 = por %p77, %p78
    %p80 = scmp.ne.s32.totalorder %s71, %s72
    %p81 = scmp.eq.s32.totalorder %s28, 0
    %p82 = por %p80, %p81
    %p83 = scmp.ne.s32.totalorder %s71, %s72
    %p84 = scmp.eq.s32.totalorder %s29, 3
    %p85 = por %p83, %p84
    %p87 = scmp.ne.s32.totalorder %s72, %s86
    %p88 = scmp.eq.s32.totalorder %s29, 0
    %p89 = por %p87, %p88
    %s91 = sadd.s32 %s90, 1
    %p94 = scmp.eq.s32.totalorder %s23, 3
    %p95 = scmp.ne.s32.totalorder %s90, %s92
    %p96 = scmp.eq.s32.totalorder %s23, 0
    %p97 = por %p95, %p96
    %p98 = scmp.ne.s32.totalorder %s90, %s92
    %p99 = scmp.eq.s32.totalorder %s28, 3
    %p100 = por %p98, %p99
    %p101 = scmp.ne.s32.totalorder %s92, %s93
    %p102 = scmp.eq.s32.totalorder %s28, 0
    %p103 = por %p101, %p102
    %p104 = scmp.ne.s32.totalorder %s92, %s93
    %p105 = scmp.eq.s32.totalorder %s29, 3
    %p106 = por %p104, %p105
    %p108 = scmp.ne.s32.totalorder %s93, %s107
    %p109 = scmp.eq.s32.totalorder %s29, 0
    %p110 = por %p108, %p109
    %s111 = ssub.s32 %s31, %s38
    %p112 = scmp.eq.s32.totalorder %s111, 0
    %s114 = sadd.s32 %s113, 1
    %s115 = scalar_select %p112, %s113, %s114
    %p118 = pneg %p112
    %p119 = scmp.eq.s32.totalorder %s23, 3
    %p120 = por %p118, %p119
    %p121 = scmp.ne.s32.totalorder %s113, %s116
    %p122 = scmp.eq.s32.totalorder %s23, 0
    %p123 = por %p121, %p122
    %p124 = scmp.ne.s32.totalorder %s113, %s116
    %p125 = scmp.eq.s32.totalorder %s28, 3
    %p126 = por %p124, %p125
    %p127 = scmp.ne.s32.totalorder %s116, %s117
    %p128 = scmp.eq.s32.totalorder %s28, 0
    %p129 = por %p127, %p128
    %p130 = scmp.ne.s32.totalorder %s116, %s117
    %p131 = scmp.eq.s32.totalorder %s29, 3
    %p132 = por %p130, %p131
    %p134 = scmp.ne.s32.totalorder %s117, %s133
    %p135 = scmp.eq.s32.totalorder %s29, 0
    %p136 = por %p134, %p135
    %s137 = ssub.s32 %s31, %s38
    %p138 = scmp.eq.s32.totalorder %s137, 0
    %s140 = sadd.s32 %s139, 1
    %s141 = scalar_select %p138, %s139, %s140
    %p144 = pneg %p138
    %p145 = scmp.eq.s32.totalorder %s23, 3
    %p146 = por %p144, %p145
    %p147 = scmp.ne.s32.totalorder %s139, %s142
    %p148 = scmp.eq.s32.totalorder %s23, 0
    %p149 = por %p147, %p148
    %p150 = scmp.ne.s32.totalorder %s139, %s142
    %p151 = scmp.eq.s32.totalorder %s28, 3
    %p152 = por %p150, %p151
    %p153 = scmp.ne.s32.totalorder %s142, %s143
    %p154 = scmp.eq.s32.totalorder %s28, 0
    %p155 = por %p153, %p154
    %p156 = scmp.ne.s32.totalorder %s142, %s143
    %p157 = scmp.eq.s32.totalorder %s29, 3
    %p158 = por %p156, %p157
    %p160 = scmp.ne.s32.totalorder %s143, %s159
    %p161 = scmp.eq.s32.totalorder %s29, 0
    %p162 = por %p160, %p161
    %s163 = ssub.s32 %s31, %s38
    %p164 = scmp.eq.s32.totalorder %s163, 0
    %s166 = sadd.s32 %s165, 1
    %s167 = scalar_select %p164, %s165, %s166
    %p170 = pneg %p164
    %p171 = scmp.eq.s32.totalorder %s23, 3
    %p172 = por %p170, %p171
    %p173 = scmp.ne.s32.totalorder %s165, %s168
    %p174 = scmp.eq.s32.totalorder %s23, 0
    %p175 = por %p173, %p174
    %p176 = scmp.ne.s32.totalorder %s165, %s168
    %p177 = scmp.eq.s32.totalorder %s28, 3
    %p178 = por %p176, %p177
    %p179 = scmp.ne.s32.totalorder %s168, %s169
    %p180 = scmp.eq.s32.totalorder %s28, 0
    %p181 = por %p179, %p180
    %p182 = scmp.ne.s32.totalorder %s168, %s169
    %p183 = scmp.eq.s32.totalorder %s29, 3
    %p184 = por %p182, %p183
    %p186 = scmp.ne.s32.totalorder %s169, %s185
    %p187 = scmp.eq.s32.totalorder %s29, 0
    %p188 = por %p186, %p187
    %s189 = ssub.s32 %s31, %s38
    %p190 = scmp.eq.s32.totalorder %s189, 0
    %s192 = sadd.s32 %s191, 1
    %s193 = scalar_select %p190, %s191, %s192
    %p196 = pneg %p190
    %p197 = scmp.eq.s32.totalorder %s23, 3
    %p198 = por %p196, %p197
    %p199 = scmp.ne.s32.totalorder %s191, %s194
    %p200 = scmp.eq.s32.totalorder %s23, 0
    %p201 = por %p199, %p200
    %p202 = scmp.ne.s32.totalorder %s191, %s194
    %p203 = scmp.eq.s32.totalorder %s28, 3
    %p204 = por %p202, %p203
    %p205 = scmp.ne.s32.totalorder %s194, %s195
    %p206 = scmp.eq.s32.totalorder %s28, 0
    %p207 = por %p205, %p206
    %p208 = scmp.ne.s32.totalorder %s194, %s195
    %p209 = scmp.eq.s32.totalorder %s29, 3
    %p210 = por %p208, %p209
    %p212 = scmp.ne.s32.totalorder %s195, %s211
    %p213 = scmp.eq.s32.totalorder %s29, 0
    %p214 = por %p212, %p213
    %s215 = ssub.s32 %s31, %s38
    %p216 = scmp.eq.s32.totalorder %s215, 0
    %s218 = sadd.s32 %s217, 1
    %s219 = scalar_select %p216, %s217, %s218
    %p222 = pneg %p216
    %p223 = scmp.eq.s32.totalorder %s23, 3
    %p224 = por %p222, %p223
    %p225 = scmp.ne.s32.totalorder %s217, %s220
    %p226 = scmp.eq.s32.totalorder %s23, 0
    %p227 = por %p225, %p226
    %p228 = scmp.ne.s32.totalorder %s217, %s220
    %p229 = scmp.eq.s32.totalorder %s28, 3
    %p230 = por %p228, %p229
    %p231 = scmp.ne.s32.totalorder %s220, %s221
    %p232 = scmp.eq.s32.totalorder %s28, 0
    %p233 = por %p231, %p232
    %p234 = scmp.ne.s32.totalorder %s220, %s221
    %p235 = scmp.eq.s32.totalorder %s29, 3
    %p236 = por %p234, %p235
    %p238 = scmp.ne.s32.totalorder %s221, %s237
    %p239 = scmp.eq.s32.totalorder %s29, 0
    %p240 = por %p238, %p239
    %s241 = ssub.s32 %s31, %s38
    %p242 = scmp.eq.s32.totalorder %s241, 0
    %s244 = sadd.s32 %s243, 1
    %s245 = scalar_select %p242, %s243, %s244
    %p248 = pneg %p242
    %p249 = scmp.eq.s32.totalorder %s23, 3
    %p250 = por %p248, %p249
    %p251 = scmp.ne.s32.totalorder %s243, %s246
    %p252 = scmp.eq.s32.totalorder %s23, 0
    %p253 = por %p251, %p252
    %p254 = scmp.ne.s32.totalorder %s243, %s246
    %p255 = scmp.eq.s32.totalorder %s28, 3
    %p256 = por %p254, %p255
    %p257 = scmp.ne.s32.totalorder %s246, %s247
    %p258 = scmp.eq.s32.totalorder %s28, 0
    %p259 = por %p257, %p258
    %p260 = scmp.ne.s32.totalorder %s246, %s247
    %p261 = scmp.eq.s32.totalorder %s29, 3
    %p262 = por %p260, %p261
    %p264 = scmp.ne.s32.totalorder %s247, %s263
    %p265 = scmp.eq.s32.totalorder %s29, 0
    %p266 = por %p264, %p265
    %s267 = ssub.s32 %s31, %s38
    %p268 = scmp.eq.s32.totalorder %s267, 0
    %s270 = sadd.s32 %s269, 1
    %s271 = scalar_select %p268, %s269, %s270
    %p274 = pneg %p268
    %p275 = scmp.eq.s32.totalorder %s23, 3
    %p276 = por %p274, %p275
    %p277 = scmp.ne.s32.totalorder %s269, %s272
    %p278 = scmp.eq.s32.totalorder %s23, 0
    %p279 = por %p277, %p278
    %p280 = scmp.ne.s32.totalorder %s269, %s272
    %p281 = scmp.eq.s32.totalorder %s28, 3
    %p282 = por %p280, %p281
    %p283 = scmp.ne.s32.totalorder %s272, %s273
    %p284 = scmp.eq.s32.totalorder %s28, 0
    %p285 = por %p283, %p284
    %p286 = scmp.ne.s32.totalorder %s272, %s273
    %p287 = scmp.eq.s32.totalorder %s29, 3
    %p288 = por %p286, %p287
    %p290 = scmp.ne.s32.totalorder %s273, %s289
    %p291 = scmp.eq.s32.totalorder %s29, 0
    %p292 = por %p290, %p291
    %s293 = ssub.s32 %s31, %s38
    %p294 = scmp.eq.s32.totalorder %s293, 0
    %s296 = sadd.s32 %s295, 1
    %s297 = scalar_select %p294, %s295, %s296
    %p300 = pneg %p294
    %p301 = scmp.eq.s32.totalorder %s23, 3
    %p302 = por %p300, %p301
    %p303 = scmp.ne.s32.totalorder %s295, %s298
    %p304 = scmp.eq.s32.totalorder %s23, 0
    %p305 = por %p303, %p304
    %p306 = scmp.ne.s32.totalorder %s295, %s298
    %p307 = scmp.eq.s32.totalorder %s28, 3
    %p308 = por %p306, %p307
    %p309 = scmp.ne.s32.totalorder %s298, %s299
    %p310 = scmp.eq.s32.totalorder %s28, 0
    %p311 = por %p309, %p310
    %p312 = scmp.ne.s32.totalorder %s298, %s299
    %p313 = scmp.eq.s32.totalorder %s29, 3
    %p314 = por %p312, %p313
    %p316 = scmp.ne.s32.totalorder %s299, %s315
    %p317 = scmp.eq.s32.totalorder %s29, 0
    %p318 = por %p316, %p317
    %s319 = ssub.s32 %s31, %s38
    %p320 = scmp.eq.s32.totalorder %s319, 0
    %s322 = sadd.s32 %s321, 1
    %s323 = scalar_select %p320, %s321, %s322
    %p326 = pneg %p320
    %p327 = scmp.eq.s32.totalorder %s23, 3
    %p328 = por %p326, %p327
    %p329 = scmp.ne.s32.totalorder %s321, %s324
    %p330 = scmp.eq.s32.totalorder %s23, 0
    %p331 = por %p329, %p330
    %p332 = scmp.ne.s32.totalorder %s321, %s324
    %p333 = scmp.eq.s32.totalorder %s28, 3
    %p334 = por %p332, %p333
    %p335 = scmp.ne.s32.totalorder %s324, %s325
    %p336 = scmp.eq.s32.totalorder %s28, 0
    %p337 = por %p335, %p336
    %p338 = scmp.ne.s32.totalorder %s324, %s325
    %p339 = scmp.eq.s32.totalorder %s29, 3
    %p340 = por %p338, %p339
    %p342 = scmp.ne.s32.totalorder %s325, %s341
    %p343 = scmp.eq.s32.totalorder %s29, 0
    %p344 = por %p342, %p343
    %s345 = ssub.s32 %s31, %s38
    %p346 = scmp.eq.s32.totalorder %s345, 0
    %s348 = sadd.s32 %s347, 1
    %s349 = scalar_select %p346, %s347, %s348
    %p352 = pneg %p346
    %p353 = scmp.eq.s32.totalorder %s23, 3
    %p354 = por %p352, %p353
    %p355 = scmp.ne.s32.totalorder %s347, %s350
    %p356 = scmp.eq.s32.totalorder %s23, 0
    %p357 = por %p355, %p356
    %p358 = scmp.ne.s32.totalorder %s347, %s350
    %p359 = scmp.eq.s32.totalorder %s28, 3
    %p360 = por %p358, %p359
    %p361 = scmp.ne.s32.totalorder %s350, %s351
    %p362 = scmp.eq.s32.totalorder %s28, 0
    %p363 = por %p361, %p362
    %p364 = scmp.ne.s32.totalorder %s350, %s351
    %p365 = scmp.eq.s32.totalorder %s29, 3
    %p366 = por %p364, %p365
    %p368 = scmp.ne.s32.totalorder %s351, %s367
    %p369 = scmp.eq.s32.totalorder %s29, 0
    %p370 = por %p368, %p369
    %s371 = ssub.s32 %s31, %s38
    %p372 = scmp.eq.s32.totalorder %s371, 0
    %s374 = sadd.s32 %s373, 1
    %s375 = scalar_select %p372, %s373, %s374
    %p378 = pneg %p372
    %p379 = scmp.eq.s32.totalorder %s23, 3
    %p380 = por %p378, %p379
    %p381 = scmp.ne.s32.totalorder %s373, %s376
    %p382 = scmp.eq.s32.totalorder %s23, 0
    %p383 = por %p381, %p382
    %p384 = scmp.ne.s32.totalorder %s373, %s376
    %p385 = scmp.eq.s32.totalorder %s28, 3
    %p386 = por %p384, %p385
    %p387 = scmp.ne.s32.totalorder %s376, %s377
    %p388 = scmp.eq.s32.totalorder %s28, 0
    %p389 = por %p387, %p388
    %p390 = scmp.ne.s32.totalorder %s376, %s377
    %p391 = scmp.eq.s32.totalorder %s29, 3
    %p392 = por %p390, %p391
    %p394 = scmp.ne.s32.totalorder %s377, %s393
    %p395 = scmp.eq.s32.totalorder %s29, 0
    %p396 = por %p394, %p395
    %s397 = ssub.s32 %s31, %s38
    %p398 = scmp.eq.s32.totalorder %s397, 0
    %s400 = sadd.s32 %s399, 1
    %s401 = scalar_select %p398, %s399, %s400
    %p404 = pneg %p398
    %p405 = scmp.eq.s32.totalorder %s23, 3
    %p406 = por %p404, %p405
    %p407 = scmp.ne.s32.totalorder %s399, %s402
    %p408 = scmp.eq.s32.totalorder %s23, 0
    %p409 = por %p407, %p408
    %p410 = scmp.ne.s32.totalorder %s399, %s402
    %p411 = scmp.eq.s32.totalorder %s28, 3
    %p412 = por %p410, %p411
    %p413 = scmp.ne.s32.totalorder %s402, %s403
    %p414 = scmp.eq.s32.totalorder %s28, 0
    %p415 = por %p413, %p414
    %p416 = scmp.ne.s32.totalorder %s402, %s403
    %p417 = scmp.eq.s32.totalorder %s29, 3
    %p418 = por %p416, %p417
    %p420 = scmp.ne.s32.totalorder %s403, %s419
    %p421 = scmp.eq.s32.totalorder %s29, 0
    %p422 = por %p420, %p421
    %s424 = sadd.s32 %s423, 1
    %p427 = scmp.eq.s32.totalorder %s23, 3
    %p428 = scmp.ne.s32.totalorder %s423, %s425
    %p429 = scmp.eq.s32.totalorder %s23, 0
    %p430 = por %p428, %p429
    %p431 = scmp.ne.s32.totalorder %s423, %s425
    %p432 = scmp.eq.s32.totalorder %s28, 3
    %p433 = por %p431, %p432
    %p434 = scmp.ne.s32.totalorder %s425, %s426
    %p435 = scmp.eq.s32.totalorder %s28, 0
    %p436 = por %p434, %p435
    %p437 = scmp.ne.s32.totalorder %s425, %s426
    %p438 = scmp.eq.s32.totalorder %s29, 3
    %p439 = por %p437, %p438
    %p441 = scmp.ne.s32.totalorder %s426, %s440
    %p442 = scmp.eq.s32.totalorder %s29, 0
    %p443 = por %p441, %p442
    %s445 = sadd.s32 %s444, 1
    %p448 = scmp.eq.s32.totalorder %s23, 3
    %p449 = scmp.ne.s32.totalorder %s444, %s446
    %p450 = scmp.eq.s32.totalorder %s23, 0
    %p451 = por %p449, %p450
    %p452 = scmp.ne.s32.totalorder %s444, %s446
    %p453 = scmp.eq.s32.totalorder %s28, 3
    %p454 = por %p452, %p453
    %p455 = scmp.ne.s32.totalorder %s446, %s447
    %p456 = scmp.eq.s32.totalorder %s28, 0
    %p457 = por %p455, %p456
    %p458 = scmp.ne.s32.totalorder %s446, %s447
    %p459 = scmp.eq.s32.totalorder %s29, 3
    %p460 = por %p458, %p459
    %p462 = scmp.ne.s32.totalorder %s447, %s461
    %p463 = scmp.eq.s32.totalorder %s29, 0
    %p464 = por %p462, %p463
    %s465 = ssub.s32 %s30, %s42
    %p466 = scmp.eq.s32.totalorder %s465, 0
    %s468 = sadd.s32 %s467, 1
    %s469 = scalar_select %p466, %s467, %s468
    %p472 = pneg %p466
    %p473 = scmp.eq.s32.totalorder %s23, 3
    %p474 = por %p472, %p473
    %p475 = scmp.ne.s32.totalorder %s467, %s470
    %p476 = scmp.eq.s32.totalorder %s23, 0
    %p477 = por %p475, %p476
    %p478 = scmp.ne.s32.totalorder %s467, %s470
    %p479 = scmp.eq.s32.totalorder %s28, 3
    %p480 = por %p478, %p479
    %p481 = scmp.ne.s32.totalorder %s470, %s471
    %p482 = scmp.eq.s32.totalorder %s28, 0
    %p483 = por %p481, %p482
    %p484 = scmp.ne.s32.totalorder %s470, %s471
    %p485 = scmp.eq.s32.totalorder %s29, 3
    %p486 = por %p484, %p485
    %p488 = scmp.ne.s32.totalorder %s471, %s487
    %p489 = scmp.eq.s32.totalorder %s29, 0
    %p490 = por %p488, %p489
    %p491 = scmp.le.s32.totalorder 1, %s23
    %p492 = scmp.lt.s32.totalorder %s23, 5
    %p493 = pnand %p491, %p492
    %p494 = pneg %p493
    // Predicated region
    $region9: #{vit_forward.1} parent=5 // pred_check
      _
    $region10: #{vit_forward.1} parent=5 // pred_check_branch
      %496 = sbr.rel (%p493) target = $region12
    $region11: #{vit_forward.1} parent=5 // pred_region
      %s497 = ssub.s32 %s23, 1
      // Predicated region
      $region13: #{vit_forward.1} parent=11 // pred_check
        %p498 = pneg %p82
      $region14: #{vit_forward.1} parent=11 // pred_check_branch
        %500 = sbr.rel (%p498) target = $region16
      $region15: #{vit_forward.1} parent=11 // pred_region
        _
      $region16: #{vit_forward.1} parent=11 // pred_fallthru
        _
      // Predicated region
      $region17: #{vit_forward.1} parent=11 // pred_check
        %p501 = pneg %p103
      $region18: #{vit_forward.1} parent=11 // pred_check_branch
        %503 = sbr.rel (%p501) target = $region20
      $region19: #{vit_forward.1} parent=11 // pred_region
        _
      $region20: #{vit_forward.1} parent=11 // pred_fallthru
        _
      // Predicated region
      $region21: #{vit_forward.1} parent=11 // pred_check
        %p504 = pneg %p436
      $region22: #{vit_forward.1} parent=11 // pred_check_branch
        %506 = sbr.rel (%p504) target = $region24
      $region23: #{vit_forward.1} parent=11 // pred_region
        _
      $region24: #{vit_forward.1} parent=11 // pred_fallthru
        _
      // Predicated region
      $region25: #{vit_forward.1} parent=11 // pred_check
        %p507 = pneg %p457
      $region26: #{vit_forward.1} parent=11 // pred_check_branch
        %509 = sbr.rel (%p507) target = $region28
      $region27: #{vit_forward.1} parent=11 // pred_region
        _
      $region28: #{vit_forward.1} parent=11 // pred_fallthru
        _
    $region12: #{vit_forward.1} parent=5 // pred_fallthru
      _
    %p510 = scmp.lt.s32.totalorder %s23, 4
    // Predicated region
    $region29: #{vit_forward.1} parent=5 // pred_check
      %p511 = pneg %p510
    $region30: #{vit_forward.1} parent=5 // pred_check_branch
      %513 = sbr.rel (%p511) target = $region32
    $region31: #{vit_forward.1} parent=5 // pred_region
      // Predicated region
      $region33: #{vit_forward.1} parent=31 // pred_check
        %p514 = pneg %p55
      $region34: #{vit_forward.1} parent=31 // pred_check_branch
        %516 = sbr.rel (%p514) target = $region36
      $region35: #{vit_forward.1} parent=31 // pred_region
        %p517 = scmp.lt.s32.totalorder %s30, 1
        %s518 = scalar_select %p517, %s30, 1
        %s519 = smul.addr %s518, 3
        %s520 = smul.addr %s519, 4
        %s521 = scalar_lea.vmem %s0, %s520
      $region36: #{vit_forward.1} parent=31 // pred_fallthru
        _
      // Predicated region
      $region37: #{vit_forward.1} parent=31 // pred_check
        %p522 = pneg %p123
      $region38: #{vit_forward.1} parent=31 // pred_check_branch
        %524 = sbr.rel (%p522) target = $region40
      $region39: #{vit_forward.1} parent=31 // pred_region
        %p525 = scmp.lt.s32.totalorder %s31, 1
        %s526 = scalar_select %p525, %s31, 1
        %s527 = scalar_lea.vmem %s3, %s526
      $region40: #{vit_forward.1} parent=31 // pred_fallthru
        _
      // Predicated region
      $region41: #{vit_forward.1} parent=31 // pred_check
        %p528 = pneg %p149
      $region42: #{vit_forward.1} parent=31 // pred_check_branch
        %530 = sbr.rel (%p528) target = $region44
      $region43: #{vit_forward.1} parent=31 // pred_region
        %p531 = scmp.lt.s32.totalorder %s31, 1
        %s532 = scalar_select %p531, %s31, 1
        %s533 = scalar_lea.vmem %s4, %s532
      $region44: #{vit_forward.1} parent=31 // pred_fallthru
        _
      // Predicated region
      $region45: #{vit_forward.1} parent=31 // pred_check
        %p534 = pneg %p175
      $region46: #{vit_forward.1} parent=31 // pred_check_branch
        %536 = sbr.rel (%p534) target = $region48
      $region47: #{vit_forward.1} parent=31 // pred_region
        %p537 = scmp.lt.s32.totalorder %s31, 1
        %s538 = scalar_select %p537, %s31, 1
        %s539 = smul.addr %s538, 4
        %s540 = smul.addr %s539, 4
        %s541 = scalar_lea.vmem %s5, %s540
      $region48: #{vit_forward.1} parent=31 // pred_fallthru
        _
      // Predicated region
      $region49: #{vit_forward.1} parent=31 // pred_check
        %p542 = pneg %p201
      $region50: #{vit_forward.1} parent=31 // pred_check_branch
        %544 = sbr.rel (%p542) target = $region52
      $region51: #{vit_forward.1} parent=31 // pred_region
        %p545 = scmp.lt.s32.totalorder %s31, 1
        %s546 = scalar_select %p545, %s31, 1
        %s547 = scalar_lea.vmem %s6, %s546
      $region52: #{vit_forward.1} parent=31 // pred_fallthru
        _
      // Predicated region
      $region53: #{vit_forward.1} parent=31 // pred_check
        %p548 = pneg %p227
      $region54: #{vit_forward.1} parent=31 // pred_check_branch
        %550 = sbr.rel (%p548) target = $region56
      $region55: #{vit_forward.1} parent=31 // pred_region
        %p551 = scmp.lt.s32.totalorder %s31, 1
        %s552 = scalar_select %p551, %s31, 1
        %s553 = smul.addr %s552, 4
        %s554 = smul.addr %s553, 4
        %s555 = scalar_lea.vmem %s7, %s554
      $region56: #{vit_forward.1} parent=31 // pred_fallthru
        _
      // Predicated region
      $region57: #{vit_forward.1} parent=31 // pred_check
        %p556 = pneg %p253
      $region58: #{vit_forward.1} parent=31 // pred_check_branch
        %558 = sbr.rel (%p556) target = $region60
      $region59: #{vit_forward.1} parent=31 // pred_region
        %p559 = scmp.lt.s32.totalorder %s31, 1
        %s560 = scalar_select %p559, %s31, 1
        %s561 = scalar_lea.vmem %s8, %s560
      $region60: #{vit_forward.1} parent=31 // pred_fallthru
        _
      // Predicated region
      $region61: #{vit_forward.1} parent=31 // pred_check
        %p562 = pneg %p279
      $region62: #{vit_forward.1} parent=31 // pred_check_branch
        %564 = sbr.rel (%p562) target = $region64
      $region63: #{vit_forward.1} parent=31 // pred_region
        %p565 = scmp.lt.s32.totalorder %s31, 1
        %s566 = scalar_select %p565, %s31, 1
        %s567 = scalar_lea.vmem %s9, %s566
      $region64: #{vit_forward.1} parent=31 // pred_fallthru
        _
      // Predicated region
      $region65: #{vit_forward.1} parent=31 // pred_check
        %p568 = pneg %p305
      $region66: #{vit_forward.1} parent=31 // pred_check_branch
        %570 = sbr.rel (%p568) target = $region68
      $region67: #{vit_forward.1} parent=31 // pred_region
        %p571 = scmp.lt.s32.totalorder %s31, 1
        %s572 = scalar_select %p571, %s31, 1
        %s573 = scalar_lea.vmem %s10, %s572
      $region68: #{vit_forward.1} parent=31 // pred_fallthru
        _
      // Predicated region
      $region69: #{vit_forward.1} parent=31 // pred_check
        %p574 = pneg %p331
      $region70: #{vit_forward.1} parent=31 // pred_check_branch
        %576 = sbr.rel (%p574) target = $region72
      $region71: #{vit_forward.1} parent=31 // pred_region
        %p577 = scmp.lt.s32.totalorder %s31, 1
        %s578 = scalar_select %p577, %s31, 1
        %s579 = smul.addr %s578, 4
        %s580 = smul.addr %s579, 4
        %s581 = scalar_lea.vmem %s11, %s580
      $region72: #{vit_forward.1} parent=31 // pred_fallthru
        _
      // Predicated region
      $region73: #{vit_forward.1} parent=31 // pred_check
        %p582 = pneg %p357
      $region74: #{vit_forward.1} parent=31 // pred_check_branch
        %584 = sbr.rel (%p582) target = $region76
      $region75: #{vit_forward.1} parent=31 // pred_region
        %p585 = scmp.lt.s32.totalorder %s31, 1
        %s586 = scalar_select %p585, %s31, 1
        %s587 = scalar_lea.vmem %s12, %s586
      $region76: #{vit_forward.1} parent=31 // pred_fallthru
        _
      // Predicated region
      $region77: #{vit_forward.1} parent=31 // pred_check
        %p588 = pneg %p383
      $region78: #{vit_forward.1} parent=31 // pred_check_branch
        %590 = sbr.rel (%p588) target = $region80
      $region79: #{vit_forward.1} parent=31 // pred_region
        %p591 = scmp.lt.s32.totalorder %s31, 1
        %s592 = scalar_select %p591, %s31, 1
        %s593 = smul.addr %s592, 16
        %s594 = smul.addr %s593, 4
        %s595 = scalar_lea.vmem %s13, %s594
      $region80: #{vit_forward.1} parent=31 // pred_fallthru
        _
      // Predicated region
      $region81: #{vit_forward.1} parent=31 // pred_check
        %p596 = pneg %p409
      $region82: #{vit_forward.1} parent=31 // pred_check_branch
        %598 = sbr.rel (%p596) target = $region84
      $region83: #{vit_forward.1} parent=31 // pred_region
        %p599 = scmp.lt.s32.totalorder %s31, 1
        %s600 = scalar_select %p599, %s31, 1
        %s601 = scalar_lea.vmem %s14, %s600
      $region84: #{vit_forward.1} parent=31 // pred_fallthru
        _
    $region32: #{vit_forward.1} parent=5 // pred_fallthru
      _
    %p602 = scmp.le.s32.totalorder 1, %s23
    %p603 = scmp.lt.s32.totalorder %s23, 5
    %p604 = pnand %p602, %p603
    %p605 = pneg %p604
    // Predicated region
    $region85: #{vit_forward.1} parent=5 // pred_check
      _
    $region86: #{vit_forward.1} parent=5 // pred_check_branch
      %607 = sbr.rel (%p604) target = $region88
    $region87: #{vit_forward.1} parent=5 // pred_region
      %s608 = ssub.s32 %s23, 1
      %p609 = scmp.lt.s32.totalorder %s32, 1
      %s610 = scalar_select %p609, %s32, 1
      %s611 = smul.addr %s610, 3
      %s612 = smul.addr %s611, 4
      %s613 = scalar_lea.vmem %s0, %s612
      %p614 = pneg %p61
      %p615 = pneg %p58
      %p616 = pneg %p82
      %p617 = pneg %p79
      %p618 = pneg %p103
      %p619 = pneg %p100
      %p620 = scmp.lt.s32.totalorder %s33, 1
      %s621 = scalar_select %p620, %s33, 1
      %s622 = scalar_lea.vmem %s3, %s621
      %p623 = pneg %p129
      %p624 = pneg %p126
      %p625 = scmp.lt.s32.totalorder %s33, 1
      %s626 = scalar_select %p625, %s33, 1
      %s627 = scalar_lea.vmem %s4, %s626
      %p628 = pneg %p155
      %p629 = pneg %p152
      %p630 = scmp.lt.s32.totalorder %s33, 1
      %s631 = scalar_select %p630, %s33, 1
      %s632 = smul.addr %s631, 4
      %s633 = smul.addr %s632, 4
      %s634 = scalar_lea.vmem %s5, %s633
      %p635 = pneg %p181
      %p636 = pneg %p178
      %p637 = scmp.lt.s32.totalorder %s33, 1
      %s638 = scalar_select %p637, %s33, 1
      %s639 = scalar_lea.vmem %s6, %s638
      %p640 = pneg %p207
      %p641 = pneg %p204
      %p642 = scmp.lt.s32.totalorder %s33, 1
      %s643 = scalar_select %p642, %s33, 1
      %s644 = smul.addr %s643, 4
      %s645 = smul.addr %s644, 4
      %s646 = scalar_lea.vmem %s7, %s645
      %p647 = pneg %p233
      %p648 = pneg %p230
      %p649 = scmp.lt.s32.totalorder %s33, 1
      %s650 = scalar_select %p649, %s33, 1
      %s651 = scalar_lea.vmem %s8, %s650
      %p652 = pneg %p259
      %p653 = pneg %p256
      %p654 = scmp.lt.s32.totalorder %s33, 1
      %s655 = scalar_select %p654, %s33, 1
      %s656 = scalar_lea.vmem %s9, %s655
      %p657 = pneg %p285
      %p658 = pneg %p282
      %p659 = scmp.lt.s32.totalorder %s33, 1
      %s660 = scalar_select %p659, %s33, 1
      %s661 = scalar_lea.vmem %s10, %s660
      %p662 = pneg %p311
      %p663 = pneg %p308
      %p664 = scmp.lt.s32.totalorder %s33, 1
      %s665 = scalar_select %p664, %s33, 1
      %s666 = smul.addr %s665, 4
      %s667 = smul.addr %s666, 4
      %s668 = scalar_lea.vmem %s11, %s667
      %p669 = pneg %p337
      %p670 = pneg %p334
      %p671 = scmp.lt.s32.totalorder %s33, 1
      %s672 = scalar_select %p671, %s33, 1
      %s673 = scalar_lea.vmem %s12, %s672
      %p674 = pneg %p363
      %p675 = pneg %p360
      %p676 = scmp.lt.s32.totalorder %s33, 1
      %s677 = scalar_select %p676, %s33, 1
      %s678 = smul.addr %s677, 16
      %s679 = smul.addr %s678, 4
      %s680 = scalar_lea.vmem %s13, %s679
      %p681 = pneg %p389
      %p682 = pneg %p386
      %p683 = scmp.lt.s32.totalorder %s33, 1
      %s684 = scalar_select %p683, %s33, 1
      %s685 = scalar_lea.vmem %s14, %s684
      %p686 = pneg %p415
      %p687 = pneg %p412
      %p688 = pneg %p436
      %p689 = pneg %p433
      %p690 = pneg %p457
      %p691 = pneg %p454
      %p692 = pneg %p483
      %p693 = pneg %p480
      %p694 = scmp.lt.s32.totalorder %s32, 1
      %s695 = scalar_select %p694, %s32, 1
      %s696 = smul.addr %s695, 3
      %s697 = smul.addr %s696, 8
      %s698 = scalar_lea.vmem %s17, %s697
      %p699 = scmp.lt.s32.totalorder %s32, 1
      %s700 = scalar_select %p699, %s32, 1
      %s701 = smul.addr %s700, 3
      %s702 = smul.addr %s701, 4
      %s703 = scalar_lea.vmem %s0, %s702
      %p704 = scmp.lt.s32.totalorder %s33, 1
      %s705 = scalar_select %p704, %s33, 1
      %s706 = scalar_lea.vmem %s3, %s705
      %p707 = scmp.lt.s32.totalorder %s33, 1
      %s708 = scalar_select %p707, %s33, 1
      %s709 = scalar_lea.vmem %s4, %s708
      %p710 = scmp.lt.s32.totalorder %s33, 1
      %s711 = scalar_select %p710, %s33, 1
      %s712 = smul.addr %s711, 4
      %s713 = smul.addr %s712, 4
      %s714 = scalar_lea.vmem %s5, %s713
      %p715 = scmp.lt.s32.totalorder %s33, 1
      %s716 = scalar_select %p715, %s33, 1
      %s717 = scalar_lea.vmem %s6, %s716
      %p718 = scmp.lt.s32.totalorder %s33, 1
      %s719 = scalar_select %p718, %s33, 1
      %s720 = smul.addr %s719, 4
      %s721 = smul.addr %s720, 4
      %s722 = scalar_lea.vmem %s7, %s721
      %p723 = scmp.lt.s32.totalorder %s33, 1
      %s724 = scalar_select %p723, %s33, 1
      %s725 = scalar_lea.vmem %s8, %s724
      %p726 = scmp.lt.s32.totalorder %s33, 1
      %s727 = scalar_select %p726, %s33, 1
      %s728 = scalar_lea.vmem %s9, %s727
      %p729 = scmp.lt.s32.totalorder %s33, 1
      %s730 = scalar_select %p729, %s33, 1
      %s731 = scalar_lea.vmem %s10, %s730
      %p732 = scmp.lt.s32.totalorder %s33, 1
      %s733 = scalar_select %p732, %s33, 1
      %s734 = smul.addr %s733, 4
      %s735 = smul.addr %s734, 4
      %s736 = scalar_lea.vmem %s11, %s735
      %p737 = scmp.lt.s32.totalorder %s33, 1
      %s738 = scalar_select %p737, %s33, 1
      %s739 = scalar_lea.vmem %s12, %s738
      %p740 = scmp.lt.s32.totalorder %s33, 1
      %s741 = scalar_select %p740, %s33, 1
      %s742 = smul.addr %s741, 16
      %s743 = smul.addr %s742, 4
      %s744 = scalar_lea.vmem %s13, %s743
      %p745 = scmp.lt.s32.totalorder %s33, 1
      %s746 = scalar_select %p745, %s33, 1
      %s747 = scalar_lea.vmem %s14, %s746
      %p748 = scmp.lt.s32.totalorder %s32, 1
      %s749 = scalar_select %p748, %s32, 1
      %s750 = smul.addr %s749, 3
      %s751 = smul.addr %s750, 8
      %s752 = scalar_lea.vmem %s17, %s751
      %p754 = scmp.eq.s32.totalorder %s33, 0
      // Predicated region
      $region89: #{vit_forward.1} parent=87 // pred_check
        %p755 = pneg %p754
      $region90: #{vit_forward.1} parent=87 // pred_check_branch
        %757 = sbr.rel (%p755) target = $region92
      $region91: #{vit_forward.1} parent=87 // pred_region
        %v758 = vld [vmem:[%s703] sm:$0xf]
        %v759 = vld [vmem:[%s703 + $0x4] sm:$0xf]
        %v760 = vld [vmem:[%s703 + $0x8] sm:$0x1]
        %v761 = vld [vmem:[%s1] sm:$0xf]
        %v762 = vld [vmem:[%s1 + $0x4] sm:$0xf]
        %v763 = vld [vmem:[%s1 + $0x8] sm:$0xf]
        %v764 = vld [vmem:[%s1 + $0xc] sm:$0xf]
        %v765 = vld [vmem:[%s1 + $0x10] sm:$0xf]
        %v766 = vld [vmem:[%s1 + $0x14] sm:$0xf]
        %v767 = vld [vmem:[%s1 + $0x18] sm:$0xf]
        %v768 = vld [vmem:[%s1 + $0x1c] sm:$0xf]
        %v769 = vld [vmem:[%s2] sm:$0xff]
        %v770 = vld [vmem:[%s2 + $0x8] sm:$0xff]
        %v771 = vld [vmem:[%s2 + $0x10] sm:$0x1]
        %v775 = vunpack.c.l.b16 %v758
        %v776 = vunpack.c.l.b16 %v759
        %v777 = vunpack.c.l.b16 %v760
        %v778 = vpack.c.b16 %v776, %v775
        %v779 = vpack.c.b16 %v777, %v777
        %v788 = vunpack.c.l.b16 %v761
        %v789 = vunpack.c.l.b16 %v762
        %v790 = vunpack.c.l.b16 %v763
        %v791 = vunpack.c.l.b16 %v764
        %v792 = vunpack.c.l.b16 %v765
        %v793 = vunpack.c.l.b16 %v766
        %v794 = vunpack.c.l.b16 %v767
        %v795 = vunpack.c.l.b16 %v768
        %v796 = vpack.c.b16 %v789, %v788
        %v797 = vpack.c.b16 %v791, %v790
        %v798 = vpack.c.b16 %v793, %v792
        %v799 = vpack.c.b16 %v795, %v794
        %vm804 = vcmask 523264
        %v806 = vsel %vm804, %v778, 0
        %v809 = vsel %vm804, %v779, 0
        %811 = vmatprep.subr.bf16.mxu0 0
        %812 = vmatpush1.bf16.msra.mxu0 %v796
        %813 = vmatprep.subr.bf16.mxu0 0
        %814 = vmatpush1.bf16.msra.mxu0 %v797
        %815 = vmatprep.subr.bf16.mxu0 0
        %816 = vmatpush1.bf16.msra.mxu0 %v798
        %817 = vmatprep.subr.bf16.mxu0 0
        %818 = vmatpush1.bf16.msra.mxu0 %v799
        %819 = vmatprep.subr.bf16.mxu0 0
        %820 = vmatpush1.bf16.msra.mxu0 0
        %821 = vmatprep.subr.bf16.mxu0 0
        %822 = vmatpush1.bf16.msra.mxu0 0
        %823 = vmatprep.subr.bf16.mxu0 0
        %824 = vmatpush1.bf16.msra.mxu0 0
        %825 = vmatprep.subr.bf16.mxu0 0
        %826 = vmatpush1.bf16.msra.mxu0 0
        %827 = vmatprep.subr.bf16.mxu0 0
        %828 = vmatpush1.bf16.msra.mxu0 0
        %829 = vmatprep.subr.bf16.mxu0 0
        %830 = vmatpush1.bf16.msra.mxu0 0
        %831 = vmatprep.subr.bf16.mxu0 0
        %832 = vmatpush1.bf16.msra.mxu0 0
        %833 = vmatprep.subr.bf16.mxu0 0
        %834 = vmatpush1.bf16.msra.mxu0 0
        %835 = vmatprep.subr.bf16.mxu0 0
        %836 = vmatpush1.bf16.msra.mxu0 0
        %837 = vmatprep.subr.bf16.mxu0 0
        %838 = vmatpush1.bf16.msra.mxu0 0
        %839 = vmatprep.subr.bf16.mxu0 0
        %840 = vmatpush1.bf16.msra.mxu0 0
        %841 = vmatprep.subr.bf16.mxu0 0
        %842 = vmatpush1.bf16.msra.mxu0 0
        %843 = vmatprep.mubr.bf16.mxu0 0
        %844 = vmatmul.mubr.bf16.gmra.mrb[0].mxu0 %v806
        %v845 = vpop.f32.mrb[0].mxu0
        %v846 = vadd.f32 %v769, %v845
        %v847 = vpop.f32.mrb[0].mxu0
        %v848 = vpop.f32.mrb[0].mxu0
        %v849 = vadd.f32 %v770, %v848
        %v850 = vpop.f32.mrb[0].mxu0
        %851 = vmatprep.mubr.bf16.mxu0 0
        %852 = vmatmul.mubr.bf16.gmra.mrb[0].mxu0 %v809
        %v853 = vpop.f32.mrb[0].mxu0
        %v854 = vadd.f32 %v771, %v853
        %v855 = vpop.f32.mrb[0].mxu0
        %v856 = vpop.f32.mrb[0].mxu0
        %v857 = vpop.f32.mrb[0].mxu0
        %858 = vdwg.mxu0
        %vm859 = vcmask 261120
        %860 = vst.msk [vmem:[#allocation2] sm:$0xff] %vm859, %v846
        %861 = vst.msk [vmem:[#allocation2 + $0x8] sm:$0xff] %vm859, %v849
        %vm862 = vcmask 253952
        %863 = vst.msk [vmem:[#allocation2 + $0x10] sm:$0x1] %vm862, %v854
      $region92: #{vit_forward.1} parent=87 // pred_fallthru
        _
      %v864 = vld [vmem:[#allocation2] sm:$0xff]
      %v865 = vld [vmem:[#allocation2 + $0x8] sm:$0xff]
      %v866 = vld [vmem:[#allocation2 + $0x10] sm:$0x1]
      %v867 = vld [vmem:[%s706] sm:$0x1]
      %v868 = vld [vmem:[%s709] sm:$0x1]
      %vm869 = vcmask 261120
      %v870 = vsel %vm869, %v864, 0.0
      %871 = vadd.xlane.f32.xlu0 %v870
      %v872 = vpop.xlane.xlu0 %871
      %v873 = vsel %vm869, %v865, 0.0
      %874 = vadd.xlane.f32.xlu0 %v873
      %v875 = vpop.xlane.xlu0 %874
      %vm876 = vcmask 253952
      %v877 = vsel %vm876, %v866, 0.0
      %878 = vadd.xlane.f32.xlu0 %v877
      %v879 = vpop.xlane.xlu0 %878
      %v880 = vrcp.pop 32.0
      %v881 = vmul.f32 %v872, %v880
      %v882 = vmul.f32 %v875, %v880
      %v883 = vmul.f32 %v879, %v880
      %v884 = vsub.f32 %v864, %v881
      %v885 = vsub.f32 %v865, %v882
      %v886 = vsub.f32 %v866, %v883
      %v887 = vmul.f32 %v884, %v884
      %v888 = vmul.f32 %v885, %v885
      %v889 = vmul.f32 %v886, %v886
      %v890 = vsel %vm869, %v887, 0.0
      %891 = vadd.xlane.f32.xlu0 %v890
      %v892 = vpop.xlane.xlu0 %891
      %v893 = vsel %vm869, %v888, 0.0
      %894 = vadd.xlane.f32.xlu0 %v893
      %v895 = vpop.xlane.xlu0 %894
      %v896 = vsel %vm876, %v889, 0.0
      %897 = vadd.xlane.f32.xlu0 %v896
      %v898 = vpop.xlane.xlu0 %897
      %v899 = vmul.f32 %v892, %v880
      %v900 = vmul.f32 %v895, %v880
      %v901 = vmul.f32 %v898, %v880
      %v902 = vadd.f32 %v899, 1e-06
      %v903 = vadd.f32 %v900, 1e-06
      %v904 = vadd.f32 %v901, 1e-06
      %v905 = vrsqrt.pop %v902
      %v906 = vrsqrt.pop %v903
      %v907 = vrsqrt.pop %v904
      %v908 = vmul.f32 %v884, %v905
      %v909 = vmul.f32 %v885, %v906
      %v910 = vmul.f32 %v886, %v907
      %v912 = vlaneseq
      %v913 = vshrl.u32 %v912, 7
      %v914 = vsub.s32 0, %v913
      %v915 = vrot.slane %v867, %v914
      %v917 = vmul.f32 %v908, %v915
      %v918 = vmul.f32 %v909, %v915
      %v919 = vmul.f32 %v910, %v915
      %v921 = vlaneseq
      %v922 = vshrl.u32 %v921, 7
      %v923 = vsub.s32 0, %v922
      %v924 = vrot.slane %v868, %v923
      %v926 = vadd.f32 %v917, %v924
      %v927 = vadd.f32 %v918, %v924
      %v928 = vadd.f32 %v919, %v924
      %v929 = vpack.c.bf16 %v927, %v926
      %v930 = vpack.c.bf16 %v928, %v928
      %v931 = vld [vmem:[%s714] sm:$0xf]
      %v932 = vld [vmem:[%s714 + $0x4] sm:$0xf]
      %v933 = vld [vmem:[%s714 + $0x8] sm:$0xf]
      %v934 = vld [vmem:[%s714 + $0xc] sm:$0xf]
      %v935 = vld [vmem:[%s717] sm:$0x1]
      %v937 = vlaneseq
      %v938 = vshrl.u32 %v937, 7
      %v939 = vsub.s32 0, %v938
      %v940 = vrot.slane %v935, %v939
      %v946 = vunpack.c.l.b16 %v931
      %v947 = vunpack.c.l.b16 %v932
      %v948 = vunpack.c.l.b16 %v933
      %v949 = vunpack.c.l.b16 %v934
      %v950 = vpack.c.b16 %v947, %v946
      %v951 = vpack.c.b16 %v949, %v948
      %v955 = vsel %vm869, %v929, 0
      %v958 = vsel %vm869, %v930, 0
      %960 = vmatprep.subr.bf16.mxu0 0
      %961 = vmatpush1.bf16.msra.mxu0 %v950
      %962 = vmatprep.subr.bf16.mxu0 0
      %963 = vmatpush1.bf16.msra.mxu0 %v951
      %964 = vmatprep.subr.bf16.mxu0 0
      %965 = vmatpush1.bf16.msra.mxu0 0
      %966 = vmatprep.subr.bf16.mxu0 0
      %967 = vmatpush1.bf16.msra.mxu0 0
      %968 = vmatprep.subr.bf16.mxu0 0
      %969 = vmatpush1.bf16.msra.mxu0 0
      %970 = vmatprep.subr.bf16.mxu0 0
      %971 = vmatpush1.bf16.msra.mxu0 0
      %972 = vmatprep.subr.bf16.mxu0 0
      %973 = vmatpush1.bf16.msra.mxu0 0
      %974 = vmatprep.subr.bf16.mxu0 0
      %975 = vmatpush1.bf16.msra.mxu0 0
      %976 = vmatprep.subr.bf16.mxu0 0
      %977 = vmatpush1.bf16.msra.mxu0 0
      %978 = vmatprep.subr.bf16.mxu0 0
      %979 = vmatpush1.bf16.msra.mxu0 0
      %980 = vmatprep.subr.bf16.mxu0 0
      %981 = vmatpush1.bf16.msra.mxu0 0
      %982 = vmatprep.subr.bf16.mxu0 0
      %983 = vmatpush1.bf16.msra.mxu0 0
      %984 = vmatprep.subr.bf16.mxu0 0
      %985 = vmatpush1.bf16.msra.mxu0 0
      %986 = vmatprep.subr.bf16.mxu0 0
      %987 = vmatpush1.bf16.msra.mxu0 0
      %988 = vmatprep.subr.bf16.mxu0 0
      %989 = vmatpush1.bf16.msra.mxu0 0
      %990 = vmatprep.subr.bf16.mxu0 0
      %991 = vmatpush1.bf16.msra.mxu0 0
      %992 = vmatprep.mubr.bf16.mxu0 0
      %993 = vmatmul.mubr.bf16.gmra.mrb[0].mxu0 %v955
      %v994 = vpop.f32.mrb[0].mxu0
      %v995 = vadd.f32 %v940, %v994
      %v996 = vpop.f32.mrb[0].mxu0
      %v997 = vpop.f32.mrb[0].mxu0
      %v998 = vadd.f32 %v940, %v997
      %v999 = vpop.f32.mrb[0].mxu0
      %1000 = vmatprep.mubr.bf16.mxu0 0
      %1001 = vmatmul.mubr.bf16.gmra.mrb[0].mxu0 %v958
      %v1002 = vpop.f32.mrb[0].mxu0
      %v1003 = vadd.f32 %v940, %v1002
      %v1004 = vpop.f32.mrb[0].mxu0
      %v1005 = vpop.f32.mrb[0].mxu0
      %v1006 = vpop.f32.mrb[0].mxu0
      %1007 = vdwg.mxu0
      %v1008 = vmul.f32 %v995, 0.35355338
      %v1009 = vmul.f32 %v998, 0.35355338
      %v1010 = vmul.f32 %v1003, 0.35355338
      %v1011 = vpack.c.bf16 %v1009, %v1008
      %v1012 = vpack.c.bf16 %v1010, %v1010
      %v1013 = vpack.c.bf16 %v998, %v995
      %v1014 = vpack.c.bf16 %v1003, %v1003
      %1017 = vrot.lane.b32.xlu0 %v1013, 96
      %v1018 = vpop.permute.xlu0 %1017
      %1019 = vrot.lane.b32.xlu0 %v1014, 96
      %v1020 = vpop.permute.xlu0 %1019
      %vm1021 = vcmask 64512
      %v1023 = vsel %vm1021, %v1011, 0
      %v1026 = vsel %vm1021, %v1012, 0
      %v1029 = vsel %vm1021, %v1018, 0
      %v1032 = vsel %vm1021, %v1020, 0
      %1034 = vmatprep.subr.bf16.mxu0 0
      %1035 = vmatpush1.bf16.xpose.msra.mxu0 %v1029
      %1036 = vmatprep.subr.bf16.mxu0 0
      %1037 = vmatpush1.bf16.xpose.msra.mxu0 %v1032
      %1038 = vmatprep.subr.bf16.mxu0 0
      %1039 = vmatpush1.bf16.xpose.msra.mxu0 0
      %1040 = vmatprep.subr.bf16.mxu0 0
      %1041 = vmatpush1.bf16.xpose.msra.mxu0 0
      %1042 = vmatprep.subr.bf16.mxu0 0
      %1043 = vmatpush1.bf16.xpose.msra.mxu0 0
      %1044 = vmatprep.subr.bf16.mxu0 0
      %1045 = vmatpush1.bf16.xpose.msra.mxu0 0
      %1046 = vmatprep.subr.bf16.mxu0 0
      %1047 = vmatpush1.bf16.xpose.msra.mxu0 0
      %1048 = vmatprep.subr.bf16.mxu0 0
      %1049 = vmatpush1.bf16.xpose.msra.mxu0 0
      %1050 = vmatprep.subr.bf16.mxu0 0
      %1051 = vmatpush1.bf16.xpose.msra.mxu0 0
      %1052 = vmatprep.subr.bf16.mxu0 0
      %1053 = vmatpush1.bf16.xpose.msra.mxu0 0
      %1054 = vmatprep.subr.bf16.mxu0 0
      %1055 = vmatpush1.bf16.xpose.msra.mxu0 0
      %1056 = vmatprep.subr.bf16.mxu0 0
      %1057 = vmatpush1.bf16.xpose.msra.mxu0 0
      %1058 = vmatprep.subr.bf16.mxu0 0
      %1059 = vmatpush1.bf16.xpose.msra.mxu0 0
      %1060 = vmatprep.subr.bf16.mxu0 0
      %1061 = vmatpush1.bf16.xpose.msra.mxu0 0
      %1062 = vmatprep.subr.bf16.mxu0 0
      %1063 = vmatpush1.bf16.xpose.msra.mxu0 0
      %1064 = vmatprep.subr.bf16.mxu0 0
      %1065 = vmatpush1.bf16.xpose.msra.mxu0 0
      %1066 = vmatprep.mubr.bf16.mxu0 0
      %1067 = vmatmul.mubr.bf16.gmra.mrb[0].mxu0 %v1023
      %v1068 = vpop.f32.mrb[0].mxu0
      %v1069 = vadd.f32 0.0, %v1068
      %v1070 = vpop.f32.mrb[0].mxu0
      %v1071 = vpop.f32.mrb[0].mxu0
      %v1072 = vadd.f32 0.0, %v1071
      %v1073 = vpop.f32.mrb[0].mxu0
      %1074 = vmatprep.mubr.bf16.mxu0 0
      %1075 = vmatmul.mubr.bf16.gmra.mrb[0].mxu0 %v1026
      %v1076 = vpop.f32.mrb[0].mxu0
      %v1077 = vadd.f32 0.0, %v1076
      %v1078 = vpop.f32.mrb[0].mxu0
      %v1079 = vpop.f32.mrb[0].mxu0
      %v1080 = vpop.f32.mrb[0].mxu0
      %1081 = vdwg.mxu0
      %vm1082 = vcmask 138240
      %v1083 = vsel %vm1082, %v1069, -inf
      %1084 = vmax.xlane.f32.xlu0 %v1083
      %v1085 = vpop.xlane.xlu0 %1084
      %v1086 = vsel %vm1082, %v1072, -inf
      %1087 = vmax.xlane.f32.xlu0 %v1086
      %v1088 = vpop.xlane.xlu0 %1087
      %vm1089 = vcmask 131072
      %v1090 = vsel %vm1089, %v1077, -inf
      %1091 = vmax.xlane.f32.xlu0 %v1090
      %v1092 = vpop.xlane.xlu0 %1091
      %v1093 = vsub.f32 %v1069, %v1085
      %v1094 = vsub.f32 %v1072, %v1088
      %v1095 = vsub.f32 %v1077, %v1092
      %v1096 = vmul.f32 %v1093, 1.442695
      %v1097 = vpow.pop %v1096
      %v1098 = vmul.f32 %v1094, 1.442695
      %v1099 = vpow.pop %v1098
      %v1100 = vmul.f32 %v1095, 1.442695
      %v1101 = vpow.pop %v1100
      %v1102 = vsel %vm1082, %v1097, 0.0
      %1103 = vadd.xlane.f32.xlu0 %v1102
      %v1104 = vpop.xlane.xlu0 %1103
      %v1105 = vsel %vm1082, %v1099, 0.0
      %1106 = vadd.xlane.f32.xlu0 %v1105
      %v1107 = vpop.xlane.xlu0 %1106
      %v1108 = vsel %vm1089, %v1101, 0.0
      %1109 = vadd.xlane.f32.xlu0 %v1108
      %v1110 = vpop.xlane.xlu0 %1109
      %v1111 = vrcp.pop %v1104
      %v1112 = vrcp.pop %v1107
      %v1113 = vrcp.pop %v1110
      %v1114 = vmul.f32 %v1097, %v1111
      %v1115 = vmul.f32 %v1099, %v1112
      %v1116 = vmul.f32 %v1101, %v1113
      %v1117 = vpack.c.bf16 %v1115, %v1114
      %v1118 = vpack.c.bf16 %v1116, %v1116
      %1119 = vrot.lane.b32.xlu0 %v1013, 64
      %v1120 = vpop.permute.xlu0 %1119
      %1121 = vrot.lane.b32.xlu0 %v1014, 64
      %v1122 = vpop.permute.xlu0 %1121
      %v1125 = vsel %vm1082, %v1117, 0
      %v1128 = vsel %vm1082, %v1118, 0
      %vm1130 = vcmask 1040384
      %v1131 = vsel 0, 4294967295, 65535
      %v1132 = vsel %vm1130, %v1131, 0
      %v1134 = vand.u32 %v1122, %v1132
      %1136 = vmatprep.subr.bf16.mxu0 0
      %1137 = vmatpush1.bf16.msra.mxu0 %v1120
      %1138 = vmatprep.subr.bf16.mxu0 0
      %1139 = vmatpush1.bf16.msra.mxu0 %v1134
      %1140 = vmatprep.subr.bf16.mxu0 0
      %1141 = vmatpush1.bf16.msra.mxu0 0
      %1142 = vmatprep.subr.bf16.mxu0 0
      %1143 = vmatpush1.bf16.msra.mxu0 0
      %1144 = vmatprep.subr.bf16.mxu0 0
      %1145 = vmatpush1.bf16.msra.mxu0 0
      %1146 = vmatprep.subr.bf16.mxu0 0
      %1147 = vmatpush1.bf16.msra.mxu0 0
      %1148 = vmatprep.subr.bf16.mxu0 0
      %1149 = vmatpush1.bf16.msra.mxu0 0
      %1150 = vmatprep.subr.bf16.mxu0 0
      %1151 = vmatpush1.bf16.msra.mxu0 0
      %1152 = vmatprep.subr.bf16.mxu0 0
      %1153 = vmatpush1.bf16.msra.mxu0 0
      %1154 = vmatprep.subr.bf16.mxu0 0
      %1155 = vmatpush1.bf16.msra.mxu0 0
      %1156 = vmatprep.subr.bf16.mxu0 0
      %1157 = vmatpush1.bf16.msra.mxu0 0
      %1158 = vmatprep.subr.bf16.mxu0 0
      %1159 = vmatpush1.bf16.msra.mxu0 0
      %1160 = vmatprep.subr.bf16.mxu0 0
      %1161 = vmatpush1.bf16.msra.mxu0 0
      %1162 = vmatprep.subr.bf16.mxu0 0
      %1163 = vmatpush1.bf16.msra.mxu0 0
      %1164 = vmatprep.subr.bf16.mxu0 0
      %1165 = vmatpush1.bf16.msra.mxu0 0
      %1166 = vmatprep.subr.bf16.mxu0 0
      %1167 = vmatpush1.bf16.msra.mxu0 0
      %1168 = vmatprep.mubr.bf16.mxu0 0
      %1169 = vmatmul.mubr.bf16.gmra.mrb[0].mxu0 %v1125
      %v1170 = vpop.f32.mrb[0].mxu0
      %v1171 = vadd.f32 0.0, %v1170
      %v1172 = vpop.f32.mrb[0].mxu0
      %v1173 = vpop.f32.mrb[0].mxu0
      %v1174 = vadd.f32 0.0, %v1173
      %v1175 = vpop.f32.mrb[0].mxu0
      %1176 = vmatprep.mubr.bf16.mxu0 0
      %1177 = vmatmul.mubr.bf16.gmra.mrb[0].mxu0 %v1128
      %v1178 = vpop.f32.mrb[0].mxu0
      %v1179 = vadd.f32 0.0, %v1178
      %v1180 = vpop.f32.mrb[0].mxu0
      %v1181 = vpop.f32.mrb[0].mxu0
      %v1182 = vpop.f32.mrb[0].mxu0
      %1183 = vdwg.mxu0
      %1184 = vst.msk [vmem:[#allocation3] sm:$0xff] %vm1021, %v1171
      %1185 = vst.msk [vmem:[#allocation3 + $0x8] sm:$0xff] %vm1021, %v1174
      %vm1186 = vcmask 57344
      %1187 = vst.msk [vmem:[#allocation3 + $0x10] sm:$0x1] %vm1186, %v1179
      %1190 = vrot.lane.b32.xlu0 %v1011, 120
      %v1191 = vpop.permute.xlu0 %1190
      %1192 = vrot.lane.b32.xlu0 %v1012, 120
      %v1193 = vpop.permute.xlu0 %1192
      %1194 = vrot.lane.b32.xlu0 %v1013, 88
      %v1195 = vpop.permute.xlu0 %1194
      %1196 = vrot.lane.b32.xlu0 %v1014, 88
      %v1197 = vpop.permute.xlu0 %1196
      %v1199 = vsel %vm1021, %v1191, 0
      %v1202 = vsel %vm1021, %v1193, 0
      %v1205 = vsel %vm1021, %v1195, 0
      %v1208 = vsel %vm1021, %v1197, 0
      %1210 = vmatprep.subr.bf16.mxu0 0
      %1211 = vmatpush1.bf16.xpose.msra.mxu0 %v1205
      %1212 = vmatprep.subr.bf16.mxu0 0
      %1213 = vmatpush1.bf16.xpose.msra.mxu0 %v1208
      %1214 = vmatprep.subr.bf16.mxu0 0
      %1215 = vmatpush1.bf16.xpose.msra.mxu0 0
      %1216 = vmatprep.subr.bf16.mxu0 0
      %1217 = vmatpush1.bf16.xpose.msra.mxu0 0
      %1218 = vmatprep.subr.bf16.mxu0 0
      %1219 = vmatpush1.bf16.xpose.msra.mxu0 0
      %1220 = vmatprep.subr.bf16.mxu0 0
      %1221 = vmatpush1.bf16.xpose.msra.mxu0 0
      %1222 = vmatprep.subr.bf16.mxu0 0
      %1223 = vmatpush1.bf16.xpose.msra.mxu0 0
      %1224 = vmatprep.subr.bf16.mxu0 0
      %1225 = vmatpush1.bf16.xpose.msra.mxu0 0
      %1226 = vmatprep.subr.bf16.mxu0 0
      %1227 = vmatpush1.bf16.xpose.msra.mxu0 0
      %1228 = vmatprep.subr.bf16.mxu0 0
      %1229 = vmatpush1.bf16.xpose.msra.mxu0 0
      %1230 = vmatprep.subr.bf16.mxu0 0
      %1231 = vmatpush1.bf16.xpose.msra.mxu0 0
      %1232 = vmatprep.subr.bf16.mxu0 0
      %1233 = vmatpush1.bf16.xpose.msra.mxu0 0
      %1234 = vmatprep.subr.bf16.mxu0 0
      %1235 = vmatpush1.bf16.xpose.msra.mxu0 0
      %1236 = vmatprep.subr.bf16.mxu0 0
      %1237 = vmatpush1.bf16.xpose.msra.mxu0 0
      %1238 = vmatprep.subr.bf16.mxu0 0
      %1239 = vmatpush1.bf16.xpose.msra.mxu0 0
      %1240 = vmatprep.subr.bf16.mxu0 0
      %1241 = vmatpush1.bf16.xpose.msra.mxu0 0
      %1242 = vmatprep.mubr.bf16.mxu0 0
      %1243 = vmatmul.mubr.bf16.gmra.mrb[0].mxu0 %v1199
      %v1244 = vpop.f32.mrb[0].mxu0
      %v1245 = vadd.f32 0.0, %v1244
      %v1246 = vpop.f32.mrb[0].mxu0
      %v1247 = vpop.f32.mrb[0].mxu0
      %v1248 = vadd.f32 0.0, %v1247
      %v1249 = vpop.f32.mrb[0].mxu0
      %1250 = vmatprep.mubr.bf16.mxu0 0
      %1251 = vmatmul.mubr.bf16.gmra.mrb[0].mxu0 %v1202
      %v1252 = vpop.f32.mrb[0].mxu0
      %v1253 = vadd.f32 0.0, %v1252
      %v1254 = vpop.f32.mrb[0].mxu0
      %v1255 = vpop.f32.mrb[0].mxu0
      %v1256 = vpop.f32.mrb[0].mxu0
      %1257 = vdwg.mxu0
      %v1258 = vsel %vm1082, %v1245, -inf
      %1259 = vmax.xlane.f32.xlu0 %v1258
      %v1260 = vpop.xlane.xlu0 %1259
      %v1261 = vsel %vm1082, %v1248, -inf
      %1262 = vmax.xlane.f32.xlu0 %v1261
      %v1263 = vpop.xlane.xlu0 %1262
      %v1264 = vsel %vm1089, %v1253, -inf
      %1265 = vmax.xlane.f32.xlu0 %v1264
      %v1266 = vpop.xlane.xlu0 %1265
      %v1267 = vsub.f32 %v1245, %v1260
      %v1268 = vsub.f32 %v1248, %v1263
      %v1269 = vsub.f32 %v1253, %v1266
      %v1270 = vmul.f32 %v1267, 1.442695
      %v1271 = vpow.pop %v1270
      %v1272 = vmul.f32 %v1268, 1.442695
      %v1273 = vpow.pop %v1272
      %v1274 = vmul.f32 %v1269, 1.442695
      %v1275 = vpow.pop %v1274
      %v1276 = vsel %vm1082, %v1271, 0.0
      %1277 = vadd.xlane.f32.xlu0 %v1276
      %v1278 = vpop.xlane.xlu0 %1277
      %v1279 = vsel %vm1082, %v1273, 0.0
      %1280 = vadd.xlane.f32.xlu0 %v1279
      %v1281 = vpop.xlane.xlu0 %1280
      %v1282 = vsel %vm1089, %v1275, 0.0
      %1283 = vadd.xlane.f32.xlu0 %v1282
      %v1284 = vpop.xlane.xlu0 %1283
      %v1285 = vrcp.pop %v1278
      %v1286 = vrcp.pop %v1281
      %v1287 = vrcp.pop %v1284
      %v1288 = vmul.f32 %v1271, %v1285
      %v1289 = vmul.f32 %v1273, %v1286
      %v1290 = vmul.f32 %v1275, %v1287
      %v1291 = vpack.c.bf16 %v1289, %v1288
      %v1292 = vpack.c.bf16 %v1290, %v1290
      %1293 = vrot.lane.b32.xlu0 %v1013, 56
      %v1294 = vpop.permute.xlu0 %1293
      %1295 = vrot.lane.b32.xlu0 %v1014, 56
      %v1296 = vpop.permute.xlu0 %1295
      %v1299 = vsel %vm1082, %v1291, 0
      %v1302 = vsel %vm1082, %v1292, 0
      %v1305 = vand.u32 %v1296, %v1132
      %1307 = vmatprep.subr.bf16.mxu0 0
      %1308 = vmatpush1.bf16.msra.mxu0 %v1294
      %1309 = vmatprep.subr.bf16.mxu0 0
      %1310 = vmatpush1.bf16.msra.mxu0 %v1305
      %1311 = vmatprep.subr.bf16.mxu0 0
      %1312 = vmatpush1.bf16.msra.mxu0 0
      %1313 = vmatprep.subr.bf16.mxu0 0
      %1314 = vmatpush1.bf16.msra.mxu0 0
      %1315 = vmatprep.subr.bf16.mxu0 0
      %1316 = vmatpush1.bf16.msra.mxu0 0
      %1317 = vmatprep.subr.bf16.mxu0 0
      %1318 = vmatpush1.bf16.msra.mxu0 0
      %1319 = vmatprep.subr.bf16.mxu0 0
      %1320 = vmatpush1.bf16.msra.mxu0 0
      %1321 = vmatprep.subr.bf16.mxu0 0
      %1322 = vmatpush1.bf16.msra.mxu0 0
      %1323 = vmatprep.subr.bf16.mxu0 0
      %1324 = vmatpush1.bf16.msra.mxu0 0
      %1325 = vmatprep.subr.bf16.mxu0 0
      %1326 = vmatpush1.bf16.msra.mxu0 0
      %1327 = vmatprep.subr.bf16.mxu0 0
      %1328 = vmatpush1.bf16.msra.mxu0 0
      %1329 = vmatprep.subr.bf16.mxu0 0
      %1330 = vmatpush1.bf16.msra.mxu0 0
      %1331 = vmatprep.subr.bf16.mxu0 0
      %1332 = vmatpush1.bf16.msra.mxu0 0
      %1333 = vmatprep.subr.bf16.mxu0 0
      %1334 = vmatpush1.bf16.msra.mxu0 0
      %1335 = vmatprep.subr.bf16.mxu0 0
      %1336 = vmatpush1.bf16.msra.mxu0 0
      %1337 = vmatprep.subr.bf16.mxu0 0
      %1338 = vmatpush1.bf16.msra.mxu0 0
      %1339 = vmatprep.mubr.bf16.mxu0 0
      %1340 = vmatmul.mubr.bf16.gmra.mrb[0].mxu0 %v1299
      %v1341 = vpop.f32.mrb[0].mxu0
      %v1342 = vadd.f32 0.0, %v1341
      %v1343 = vpop.f32.mrb[0].mxu0
      %v1344 = vpop.f32.mrb[0].mxu0
      %v1345 = vadd.f32 0.0, %v1344
      %v1346 = vpop.f32.mrb[0].mxu0
      %1347 = vmatprep.mubr.bf16.mxu0 0
      %1348 = vmatmul.mubr.bf16.gmra.mrb[0].mxu0 %v1302
      %v1349 = vpop.f32.mrb[0].mxu0
      %v1350 = vadd.f32 0.0, %v1349
      %v1351 = vpop.f32.mrb[0].mxu0
      %v1352 = vpop.f32.mrb[0].mxu0
      %v1353 = vpop.f32.mrb[0].mxu0
      %1354 = vdwg.mxu0
      %1358 = vrot.lane.b32.xlu0 %v1342, 8
      %v1359 = vpop.permute.xlu0 %1358
      %1360 = vrot.lane.b32.xlu0 %v1345, 8
      %v1361 = vpop.permute.xlu0 %1360
      %1362 = vrot.lane.b32.xlu0 %v1350, 8
      %v1363 = vpop.permute.xlu0 %1362
      %vm1367 = vcmask 130112
      %1368 = vst.msk [vmem:[#allocation3] sm:$0xff] %vm1367, %v1359
      %1369 = vst.msk [vmem:[#allocation3 + $0x8] sm:$0xff] %vm1367, %v1361
      %vm1370 = vcmask 122944
      %1371 = vst.msk [vmem:[#allocation3 + $0x10] sm:$0x1] %vm1370, %v1363
      %1372 = vrot.lane.b32.xlu0 %v1011, 112
      %v1373 = vpop.permute.xlu0 %1372
      %1374 = vrot.lane.b32.xlu0 %v1012, 112
      %v1375 = vpop.permute.xlu0 %1374
      %1376 = vrot.lane.b32.xlu0 %v1013, 80
      %v1377 = vpop.permute.xlu0 %1376
      %1378 = vrot.lane.b32.xlu0 %v1014, 80
      %v1379 = vpop.permute.xlu0 %1378
      %v1381 = vsel %vm1021, %v1373, 0
      %v1384 = vsel %vm1021, %v1375, 0
      %v1387 = vsel %vm1021, %v1377, 0
      %v1390 = vsel %vm1021, %v1379, 0
      %1392 = vmatprep.subr.bf16.mxu0 0
      %1393 = vmatpush1.bf16.xpose.msra.mxu0 %v1387
      %1394 = vmatprep.subr.bf16.mxu0 0
      %1395 = vmatpush1.bf16.xpose.msra.mxu0 %v1390
      %1396 = vmatprep.subr.bf16.mxu0 0
      %1397 = vmatpush1.bf16.xpose.msra.mxu0 0
      %1398 = vmatprep.subr.bf16.mxu0 0
      %1399 = vmatpush1.bf16.xpose.msra.mxu0 0
      %1400 = vmatprep.subr.bf16.mxu0 0
      %1401 = vmatpush1.bf16.xpose.msra.mxu0 0
      %1402 = vmatprep.subr.bf16.mxu0 0
      %1403 = vmatpush1.bf16.xpose.msra.mxu0 0
      %1404 = vmatprep.subr.bf16.mxu0 0
      %1405 = vmatpush1.bf16.xpose.msra.mxu0 0
      %1406 = vmatprep.subr.bf16.mxu0 0
      %1407 = vmatpush1.bf16.xpose.msra.mxu0 0
      %1408 = vmatprep.subr.bf16.mxu0 0
      %1409 = vmatpush1.bf16.xpose.msra.mxu0 0
      %1410 = vmatprep.subr.bf16.mxu0 0
      %1411 = vmatpush1.bf16.xpose.msra.mxu0 0
      %1412 = vmatprep.subr.bf16.mxu0 0
      %1413 = vmatpush1.bf16.xpose.msra.mxu0 0
      %1414 = vmatprep.subr.bf16.mxu0 0
      %1415 = vmatpush1.bf16.xpose.msra.mxu0 0
      %1416 = vmatprep.subr.bf16.mxu0 0
      %1417 = vmatpush1.bf16.xpose.msra.mxu0 0
      %1418 = vmatprep.subr.bf16.mxu0 0
      %1419 = vmatpush1.bf16.xpose.msra.mxu0 0
      %1420 = vmatprep.subr.bf16.mxu0 0
      %1421 = vmatpush1.bf16.xpose.msra.mxu0 0
      %1422 = vmatprep.subr.bf16.mxu0 0
      %1423 = vmatpush1.bf16.xpose.msra.mxu0 0
      %1424 = vmatprep.mubr.bf16.mxu0 0
      %1425 = vmatmul.mubr.bf16.gmra.mrb[0].mxu0 %v1381
      %v1426 = vpop.f32.mrb[0].mxu0
      %v1427 = vadd.f32 0.0, %v1426
      %v1428 = vpop.f32.mrb[0].mxu0
      %v1429 = vpop.f32.mrb[0].mxu0
      %v1430 = vadd.f32 0.0, %v1429
      %v1431 = vpop.f32.mrb[0].mxu0
      %1432 = vmatprep.mubr.bf16.mxu0 0
      %1433 = vmatmul.mubr.bf16.gmra.mrb[0].mxu0 %v1384
      %v1434 = vpop.f32.mrb[0].mxu0
      %v1435 = vadd.f32 0.0, %v1434
      %v1436 = vpop.f32.mrb[0].mxu0
      %v1437 = vpop.f32.mrb[0].mxu0
      %v1438 = vpop.f32.mrb[0].mxu0
      %1439 = vdwg.mxu0
      %v1440 = vsel %vm1082, %v1427, -inf
      %1441 = vmax.xlane.f32.xlu0 %v1440
      %v1442 = vpop.xlane.xlu0 %1441
      %v1443 = vsel %vm1082, %v1430, -inf
      %1444 = vmax.xlane.f32.xlu0 %v1443
      %v1445 = vpop.xlane.xlu0 %1444
      %v1446 = vsel %vm1089, %v1435, -inf
      %1447 = vmax.xlane.f32.xlu0 %v1446
      %v1448 = vpop.xlane.xlu0 %1447
      %v1449 = vsub.f32 %v1427, %v1442
      %v1450 = vsub.f32 %v1430, %v1445
      %v1451 = vsub.f32 %v1435, %v1448
      %v1452 = vmul.f32 %v1449, 1.442695
      %v1453 = vpow.pop %v1452
      %v1454 = vmul.f32 %v1450, 1.442695
      %v1455 = vpow.pop %v1454
      %v1456 = vmul.f32 %v1451, 1.442695
      %v1457 = vpow.pop %v1456
      %v1458 = vsel %vm1082, %v1453, 0.0
      %1459 = vadd.xlane.f32.xlu0 %v1458
      %v1460 = vpop.xlane.xlu0 %1459
      %v1461 = vsel %vm1082, %v1455, 0.0
      %1462 = vadd.xlane.f32.xlu0 %v1461
      %v1463 = vpop.xlane.xlu0 %1462
      %v1464 = vsel %vm1089, %v1457, 0.0
      %1465 = vadd.xlane.f32.xlu0 %v1464
      %v1466 = vpop.xlane.xlu0 %1465
      %v1467 = vrcp.pop %v1460
      %v1468 = vrcp.pop %v1463
      %v1469 = vrcp.pop %v1466
      %v1470 = vmul.f32 %v1453, %v1467
      %v1471 = vmul.f32 %v1455, %v1468
      %v1472 = vmul.f32 %v1457, %v1469
      %v1473 = vpack.c.bf16 %v1471, %v1470
      %v1474 = vpack.c.bf16 %v1472, %v1472
      %1475 = vrot.lane.b32.xlu0 %v1013, 48
      %v1476 = vpop.permute.xlu0 %1475
      %1477 = vrot.lane.b32.xlu0 %v1014, 48
      %v1478 = vpop.permute.xlu0 %1477
      %v1481 = vsel %vm1082, %v1473, 0
      %v1484 = vsel %vm1082, %v1474, 0
      %v1487 = vand.u32 %v1478, %v1132
      %1489 = vmatprep.subr.bf16.mxu0 0
      %1490 = vmatpush1.bf16.msra.mxu0 %v1476
      %1491 = vmatprep.subr.bf16.mxu0 0
      %1492 = vmatpush1.bf16.msra.mxu0 %v1487
      %1493 = vmatprep.subr.bf16.mxu0 0
      %1494 = vmatpush1.bf16.msra.mxu0 0
      %1495 = vmatprep.subr.bf16.mxu0 0
      %1496 = vmatpush1.bf16.msra.mxu0 0
      %1497 = vmatprep.subr.bf16.mxu0 0
      %1498 = vmatpush1.bf16.msra.mxu0 0
      %1499 = vmatprep.subr.bf16.mxu0 0
      %1500 = vmatpush1.bf16.msra.mxu0 0
      %1501 = vmatprep.subr.bf16.mxu0 0
      %1502 = vmatpush1.bf16.msra.mxu0 0
      %1503 = vmatprep.subr.bf16.mxu0 0
      %1504 = vmatpush1.bf16.msra.mxu0 0
      %1505 = vmatprep.subr.bf16.mxu0 0
      %1506 = vmatpush1.bf16.msra.mxu0 0
      %1507 = vmatprep.subr.bf16.mxu0 0
      %1508 = vmatpush1.bf16.msra.mxu0 0
      %1509 = vmatprep.subr.bf16.mxu0 0
      %1510 = vmatpush1.bf16.msra.mxu0 0
      %1511 = vmatprep.subr.bf16.mxu0 0
      %1512 = vmatpush1.bf16.msra.mxu0 0
      %1513 = vmatprep.subr.bf16.mxu0 0
      %1514 = vmatpush1.bf16.msra.mxu0 0
      %1515 = vmatprep.subr.bf16.mxu0 0
      %1516 = vmatpush1.bf16.msra.mxu0 0
      %1517 = vmatprep.subr.bf16.mxu0 0
      %1518 = vmatpush1.bf16.msra.mxu0 0
      %1519 = vmatprep.subr.bf16.mxu0 0
      %1520 = vmatpush1.bf16.msra.mxu0 0
      %1521 = vmatprep.mubr.bf16.mxu0 0
      %1522 = vmatmul.mubr.bf16.gmra.mrb[0].mxu0 %v1481
      %v1523 = vpop.f32.mrb[0].mxu0
      %v1524 = vadd.f32 0.0, %v1523
      %v1525 = vpop.f32.mrb[0].mxu0
      %v1526 = vpop.f32.mrb[0].mxu0
      %v1527 = vadd.f32 0.0, %v1526
      %v1528 = vpop.f32.mrb[0].mxu0
      %1529 = vmatprep.mubr.bf16.mxu0 0
      %1530 = vmatmul.mubr.bf16.gmra.mrb[0].mxu0 %v1484
      %v1531 = vpop.f32.mrb[0].mxu0
      %v1532 = vadd.f32 0.0, %v1531
      %v1533 = vpop.f32.mrb[0].mxu0
      %v1534 = vpop.f32.mrb[0].mxu0
      %v1535 = vpop.f32.mrb[0].mxu0
      %1536 = vdwg.mxu0
      %1540 = vrot.lane.b32.xlu0 %v1524, 16
      %v1541 = vpop.permute.xlu0 %1540
      %1542 = vrot.lane.b32.xlu0 %v1527, 16
      %v1543 = vpop.permute.xlu0 %1542
      %1544 = vrot.lane.b32.xlu0 %v1532, 16
      %v1545 = vpop.permute.xlu0 %1544
      %vm1549 = vcmask 195712
      %1550 = vst.msk [vmem:[#allocation3] sm:$0xff] %vm1549, %v1541
      %1551 = vst.msk [vmem:[#allocation3 + $0x8] sm:$0xff] %vm1549, %v1543
      %vm1552 = vcmask 188544
      %1553 = vst.msk [vmem:[#allocation3 + $0x10] sm:$0x1] %vm1552, %v1545
      %1554 = vrot.lane.b32.xlu0 %v1011, 104
      %v1555 = vpop.permute.xlu0 %1554
      %1556 = vrot.lane.b32.xlu0 %v1012, 104
      %v1557 = vpop.permute.xlu0 %1556
      %1558 = vrot.lane.b32.xlu0 %v1013, 72
      %v1559 = vpop.permute.xlu0 %1558
      %1560 = vrot.lane.b32.xlu0 %v1014, 72
      %v1561 = vpop.permute.xlu0 %1560
      %v1563 = vsel %vm1021, %v1555, 0
      %v1566 = vsel %vm1021, %v1557, 0
      %v1569 = vsel %vm1021, %v1559, 0
      %v1572 = vsel %vm1021, %v1561, 0
      %1574 = vmatprep.subr.bf16.mxu0 0
      %1575 = vmatpush1.bf16.xpose.msra.mxu0 %v1569
      %1576 = vmatprep.subr.bf16.mxu0 0
      %1577 = vmatpush1.bf16.xpose.msra.mxu0 %v1572
      %1578 = vmatprep.subr.bf16.mxu0 0
      %1579 = vmatpush1.bf16.xpose.msra.mxu0 0
      %1580 = vmatprep.subr.bf16.mxu0 0
      %1581 = vmatpush1.bf16.xpose.msra.mxu0 0
      %1582 = vmatprep.subr.bf16.mxu0 0
      %1583 = vmatpush1.bf16.xpose.msra.mxu0 0
      %1584 = vmatprep.subr.bf16.mxu0 0
      %1585 = vmatpush1.bf16.xpose.msra.mxu0 0
      %1586 = vmatprep.subr.bf16.mxu0 0
      %1587 = vmatpush1.bf16.xpose.msra.mxu0 0
      %1588 = vmatprep.subr.bf16.mxu0 0
      %1589 = vmatpush1.bf16.xpose.msra.mxu0 0
      %1590 = vmatprep.subr.bf16.mxu0 0
      %1591 = vmatpush1.bf16.xpose.msra.mxu0 0
      %1592 = vmatprep.subr.bf16.mxu0 0
      %1593 = vmatpush1.bf16.xpose.msra.mxu0 0
      %1594 = vmatprep.subr.bf16.mxu0 0
      %1595 = vmatpush1.bf16.xpose.msra.mxu0 0
      %1596 = vmatprep.subr.bf16.mxu0 0
      %1597 = vmatpush1.bf16.xpose.msra.mxu0 0
      %1598 = vmatprep.subr.bf16.mxu0 0
      %1599 = vmatpush1.bf16.xpose.msra.mxu0 0
      %1600 = vmatprep.subr.bf16.mxu0 0
      %1601 = vmatpush1.bf16.xpose.msra.mxu0 0
      %1602 = vmatprep.subr.bf16.mxu0 0
      %1603 = vmatpush1.bf16.xpose.msra.mxu0 0
      %1604 = vmatprep.subr.bf16.mxu0 0
      %1605 = vmatpush1.bf16.xpose.msra.mxu0 0
      %1606 = vmatprep.mubr.bf16.mxu0 0
      %1607 = vmatmul.mubr.bf16.gmra.mrb[0].mxu0 %v1563
      %v1608 = vpop.f32.mrb[0].mxu0
      %v1609 = vadd.f32 0.0, %v1608
      %v1610 = vpop.f32.mrb[0].mxu0
      %v1611 = vpop.f32.mrb[0].mxu0
      %v1612 = vadd.f32 0.0, %v1611
      %v1613 = vpop.f32.mrb[0].mxu0
      %1614 = vmatprep.mubr.bf16.mxu0 0
      %1615 = vmatmul.mubr.bf16.gmra.mrb[0].mxu0 %v1566
      %v1616 = vpop.f32.mrb[0].mxu0
      %v1617 = vadd.f32 0.0, %v1616
      %v1618 = vpop.f32.mrb[0].mxu0
      %v1619 = vpop.f32.mrb[0].mxu0
      %v1620 = vpop.f32.mrb[0].mxu0
      %1621 = vdwg.mxu0
      %v1622 = vsel %vm1082, %v1609, -inf
      %1623 = vmax.xlane.f32.xlu0 %v1622
      %v1624 = vpop.xlane.xlu0 %1623
      %v1625 = vsel %vm1082, %v1612, -inf
      %1626 = vmax.xlane.f32.xlu0 %v1625
      %v1627 = vpop.xlane.xlu0 %1626
      %v1628 = vsel %vm1089, %v1617, -inf
      %1629 = vmax.xlane.f32.xlu0 %v1628
      %v1630 = vpop.xlane.xlu0 %1629
      %v1631 = vsub.f32 %v1609, %v1624
      %v1632 = vsub.f32 %v1612, %v1627
      %v1633 = vsub.f32 %v1617, %v1630
      %v1634 = vmul.f32 %v1631, 1.442695
      %v1635 = vpow.pop %v1634
      %v1636 = vmul.f32 %v1632, 1.442695
      %v1637 = vpow.pop %v1636
      %v1638 = vmul.f32 %v1633, 1.442695
      %v1639 = vpow.pop %v1638
      %v1640 = vsel %vm1082, %v1635, 0.0
      %1641 = vadd.xlane.f32.xlu0 %v1640
      %v1642 = vpop.xlane.xlu0 %1641
      %v1643 = vsel %vm1082, %v1637, 0.0
      %1644 = vadd.xlane.f32.xlu0 %v1643
      %v1645 = vpop.xlane.xlu0 %1644
      %v1646 = vsel %vm1089, %v1639, 0.0
      %1647 = vadd.xlane.f32.xlu0 %v1646
      %v1648 = vpop.xlane.xlu0 %1647
      %v1649 = vrcp.pop %v1642
      %v1650 = vrcp.pop %v1645
      %v1651 = vrcp.pop %v1648
      %v1652 = vmul.f32 %v1635, %v1649
      %v1653 = vmul.f32 %v1637, %v1650
      %v1654 = vmul.f32 %v1639, %v1651
      %v1655 = vpack.c.bf16 %v1653, %v1652
      %v1656 = vpack.c.bf16 %v1654, %v1654
      %1657 = vrot.lane.b32.xlu0 %v1013, 40
      %v1658 = vpop.permute.xlu0 %1657
      %1659 = vrot.lane.b32.xlu0 %v1014, 40
      %v1660 = vpop.permute.xlu0 %1659
      %v1663 = vsel %vm1082, %v1655, 0
      %v1666 = vsel %vm1082, %v1656, 0
      %v1669 = vand.u32 %v1660, %v1132
      %1671 = vmatprep.subr.bf16.mxu0 0
      %1672 = vmatpush1.bf16.msra.mxu0 %v1658
      %1673 = vmatprep.subr.bf16.mxu0 0
      %1674 = vmatpush1.bf16.msra.mxu0 %v1669
      %1675 = vmatprep.subr.bf16.mxu0 0
      %1676 = vmatpush1.bf16.msra.mxu0 0
      %1677 = vmatprep.subr.bf16.mxu0 0
      %1678 = vmatpush1.bf16.msra.mxu0 0
      %1679 = vmatprep.subr.bf16.mxu0 0
      %1680 = vmatpush1.bf16.msra.mxu0 0
      %1681 = vmatprep.subr.bf16.mxu0 0
      %1682 = vmatpush1.bf16.msra.mxu0 0
      %1683 = vmatprep.subr.bf16.mxu0 0
      %1684 = vmatpush1.bf16.msra.mxu0 0
      %1685 = vmatprep.subr.bf16.mxu0 0
      %1686 = vmatpush1.bf16.msra.mxu0 0
      %1687 = vmatprep.subr.bf16.mxu0 0
      %1688 = vmatpush1.bf16.msra.mxu0 0
      %1689 = vmatprep.subr.bf16.mxu0 0
      %1690 = vmatpush1.bf16.msra.mxu0 0
      %1691 = vmatprep.subr.bf16.mxu0 0
      %1692 = vmatpush1.bf16.msra.mxu0 0
      %1693 = vmatprep.subr.bf16.mxu0 0
      %1694 = vmatpush1.bf16.msra.mxu0 0
      %1695 = vmatprep.subr.bf16.mxu0 0
      %1696 = vmatpush1.bf16.msra.mxu0 0
      %1697 = vmatprep.subr.bf16.mxu0 0
      %1698 = vmatpush1.bf16.msra.mxu0 0
      %1699 = vmatprep.subr.bf16.mxu0 0
      %1700 = vmatpush1.bf16.msra.mxu0 0
      %1701 = vmatprep.subr.bf16.mxu0 0
      %1702 = vmatpush1.bf16.msra.mxu0 0
      %1703 = vmatprep.mubr.bf16.mxu0 0
      %1704 = vmatmul.mubr.bf16.gmra.mrb[0].mxu0 %v1663
      %v1705 = vpop.f32.mrb[0].mxu0
      %v1706 = vadd.f32 0.0, %v1705
      %v1707 = vpop.f32.mrb[0].mxu0
      %v1708 = vpop.f32.mrb[0].mxu0
      %v1709 = vadd.f32 0.0, %v1708
      %v1710 = vpop.f32.mrb[0].mxu0
      %1711 = vmatprep.mubr.bf16.mxu0 0
      %1712 = vmatmul.mubr.bf16.gmra.mrb[0].mxu0 %v1666
      %v1713 = vpop.f32.mrb[0].mxu0
      %v1714 = vadd.f32 0.0, %v1713
      %v1715 = vpop.f32.mrb[0].mxu0
      %v1716 = vpop.f32.mrb[0].mxu0
      %v1717 = vpop.f32.mrb[0].mxu0
      %1718 = vdwg.mxu0
      %1722 = vrot.lane.b32.xlu0 %v1706, 24
      %v1723 = vpop.permute.xlu0 %1722
      %1724 = vrot.lane.b32.xlu0 %v1709, 24
      %v1725 = vpop.permute.xlu0 %1724
      %1726 = vrot.lane.b32.xlu0 %v1714, 24
      %v1727 = vpop.permute.xlu0 %1726
      %vm1731 = vcmask 261312
      %1732 = vst.msk [vmem:[#allocation3] sm:$0xff] %vm1731, %v1723
      %1733 = vst.msk [vmem:[#allocation3 + $0x8] sm:$0xff] %vm1731, %v1725
      %vm1734 = vcmask 254144
      %1735 = vst.msk [vmem:[#allocation3 + $0x10] sm:$0x1] %vm1734, %v1727
      %v1736 = vld [vmem:[#allocation3] sm:$0xff]
      %v1737 = vld [vmem:[#allocation3 + $0x8] sm:$0xff]
      %v1738 = vld [vmem:[#allocation3 + $0x10] sm:$0x1]
      %v1739 = vpack.c.bf16 %v1737, %v1736
      %v1740 = vpack.c.bf16 %v1738, %v1738
      %v1741 = vld [vmem:[%s722] sm:$0xf]
      %v1742 = vld [vmem:[%s722 + $0x4] sm:$0xf]
      %v1743 = vld [vmem:[%s722 + $0x8] sm:$0xf]
      %v1744 = vld [vmem:[%s722 + $0xc] sm:$0xf]
      %v1745 = vld [vmem:[%s725] sm:$0x1]
      %v1747 = vlaneseq
      %v1748 = vshrl.u32 %v1747, 7
      %v1749 = vsub.s32 0, %v1748
      %v1750 = vrot.slane %v1745, %v1749
      %v1756 = vunpack.c.l.b16 %v1741
      %v1757 = vunpack.c.l.b16 %v1742
      %v1758 = vunpack.c.l.b16 %v1743
      %v1759 = vunpack.c.l.b16 %v1744
      %v1760 = vpack.c.b16 %v1757, %v1756
      %v1761 = vpack.c.b16 %v1759, %v1758
      %v1765 = vsel %vm869, %v1739, 0
      %v1768 = vsel %vm869, %v1740, 0
      %1770 = vmatprep.subr.bf16.mxu0 0
      %1771 = vmatpush1.bf16.msra.mxu0 %v1760
      %1772 = vmatprep.subr.bf16.mxu0 0
      %1773 = vmatpush1.bf16.msra.mxu0 %v1761
      %1774 = vmatprep.subr.bf16.mxu0 0
      %1775 = vmatpush1.bf16.msra.mxu0 0
      %1776 = vmatprep.subr.bf16.mxu0 0
      %1777 = vmatpush1.bf16.msra.mxu0 0
      %1778 = vmatprep.subr.bf16.mxu0 0
      %1779 = vmatpush1.bf16.msra.mxu0 0
      %1780 = vmatprep.subr.bf16.mxu0 0
      %1781 = vmatpush1.bf16.msra.mxu0 0
      %1782 = vmatprep.subr.bf16.mxu0 0
      %1783 = vmatpush1.bf16.msra.mxu0 0
      %1784 = vmatprep.subr.bf16.mxu0 0
      %1785 = vmatpush1.bf16.msra.mxu0 0
      %1786 = vmatprep.subr.bf16.mxu0 0
      %1787 = vmatpush1.bf16.msra.mxu0 0
      %1788 = vmatprep.subr.bf16.mxu0 0
      %1789 = vmatpush1.bf16.msra.mxu0 0
      %1790 = vmatprep.subr.bf16.mxu0 0
      %1791 = vmatpush1.bf16.msra.mxu0 0
      %1792 = vmatprep.subr.bf16.mxu0 0
      %1793 = vmatpush1.bf16.msra.mxu0 0
      %1794 = vmatprep.subr.bf16.mxu0 0
      %1795 = vmatpush1.bf16.msra.mxu0 0
      %1796 = vmatprep.subr.bf16.mxu0 0
      %1797 = vmatpush1.bf16.msra.mxu0 0
      %1798 = vmatprep.subr.bf16.mxu0 0
      %1799 = vmatpush1.bf16.msra.mxu0 0
      %1800 = vmatprep.subr.bf16.mxu0 0
      %1801 = vmatpush1.bf16.msra.mxu0 0
      %1802 = vmatprep.mubr.bf16.mxu0 0
      %1803 = vmatmul.mubr.bf16.gmra.mrb[0].mxu0 %v1765
      %v1804 = vpop.f32.mrb[0].mxu0
      %v1805 = vadd.f32 %v1750, %v1804
      %v1806 = vpop.f32.mrb[0].mxu0
      %v1807 = vpop.f32.mrb[0].mxu0
      %v1808 = vadd.f32 %v1750, %v1807
      %v1809 = vpop.f32.mrb[0].mxu0
      %1810 = vmatprep.mubr.bf16.mxu0 0
      %1811 = vmatmul.mubr.bf16.gmra.mrb[0].mxu0 %v1768
      %v1812 = vpop.f32.mrb[0].mxu0
      %v1813 = vadd.f32 %v1750, %v1812
      %v1814 = vpop.f32.mrb[0].mxu0
      %v1815 = vpop.f32.mrb[0].mxu0
      %v1816 = vpop.f32.mrb[0].mxu0
      %1817 = vdwg.mxu0
      %v1818 = vadd.f32 %v864, %v1805
      %v1819 = vadd.f32 %v865, %v1808
      %v1820 = vadd.f32 %v866, %v1813
      %v1821 = vld [vmem:[%s728] sm:$0x1]
      %v1822 = vld [vmem:[%s731] sm:$0x1]
      %v1823 = vsel %vm869, %v1818, 0.0
      %1824 = vadd.xlane.f32.xlu0 %v1823
      %v1825 = vpop.xlane.xlu0 %1824
      %v1826 = vsel %vm869, %v1819, 0.0
      %1827 = vadd.xlane.f32.xlu0 %v1826
      %v1828 = vpop.xlane.xlu0 %1827
      %v1829 = vsel %vm876, %v1820, 0.0
      %1830 = vadd.xlane.f32.xlu0 %v1829
      %v1831 = vpop.xlane.xlu0 %1830
      %v1832 = vmul.f32 %v1825, %v880
      %v1833 = vmul.f32 %v1828, %v880
      %v1834 = vmul.f32 %v1831, %v880
      %v1835 = vsub.f32 %v1818, %v1832
      %v1836 = vsub.f32 %v1819, %v1833
      %v1837 = vsub.f32 %v1820, %v1834
      %v1838 = vmul.f32 %v1835, %v1835
      %v1839 = vmul.f32 %v1836, %v1836
      %v1840 = vmul.f32 %v1837, %v1837
      %v1841 = vsel %vm869, %v1838, 0.0
      %1842 = vadd.xlane.f32.xlu0 %v1841
      %v1843 = vpop.xlane.xlu0 %1842
      %v1844 = vsel %vm869, %v1839, 0.0
      %1845 = vadd.xlane.f32.xlu0 %v1844
      %v1846 = vpop.xlane.xlu0 %1845
      %v1847 = vsel %vm876, %v1840, 0.0
      %1848 = vadd.xlane.f32.xlu0 %v1847
      %v1849 = vpop.xlane.xlu0 %1848
      %v1850 = vmul.f32 %v1843, %v880
      %v1851 = vmul.f32 %v1846, %v880
      %v1852 = vmul.f32 %v1849, %v880
      %v1853 = vadd.f32 %v1850, 1e-06
      %v1854 = vadd.f32 %v1851, 1e-06
      %v1855 = vadd.f32 %v1852, 1e-06
      %v1856 = vrsqrt.pop %v1853
      %v1857 = vrsqrt.pop %v1854
      %v1858 = vrsqrt.pop %v1855
      %v1859 = vmul.f32 %v1835, %v1856
      %v1860 = vmul.f32 %v1836, %v1857
      %v1861 = vmul.f32 %v1837, %v1858
      %v1863 = vlaneseq
      %v1864 = vshrl.u32 %v1863, 7
      %v1865 = vsub.s32 0, %v1864
      %v1866 = vrot.slane %v1821, %v1865
      %v1868 = vmul.f32 %v1859, %v1866
      %v1869 = vmul.f32 %v1860, %v1866
      %v1870 = vmul.f32 %v1861, %v1866
      %v1872 = vlaneseq
      %v1873 = vshrl.u32 %v1872, 7
      %v1874 = vsub.s32 0, %v1873
      %v1875 = vrot.slane %v1822, %v1874
      %v1877 = vadd.f32 %v1868, %v1875
      %v1878 = vadd.f32 %v1869, %v1875
      %v1879 = vadd.f32 %v1870, %v1875
      %v1880 = vpack.c.bf16 %v1878, %v1877
      %v1881 = vpack.c.bf16 %v1879, %v1879
      %v1882 = vld [vmem:[%s736] sm:$0xf]
      %v1883 = vld [vmem:[%s736 + $0x4] sm:$0xf]
      %v1884 = vld [vmem:[%s736 + $0x8] sm:$0xf]
      %v1885 = vld [vmem:[%s736 + $0xc] sm:$0xf]
      %v1886 = vld [vmem:[%s739] sm:$0x1]
      %v1888 = vlaneseq
      %v1889 = vshrl.u32 %v1888, 7
      %v1890 = vsub.s32 0, %v1889
      %v1891 = vrot.slane %v1886, %v1890
      %v1897 = vunpack.c.l.b16 %v1882
      %v1898 = vunpack.c.l.b16 %v1883
      %v1899 = vunpack.c.l.b16 %v1884
      %v1900 = vunpack.c.l.b16 %v1885
      %v1901 = vpack.c.b16 %v1898, %v1897
      %v1902 = vpack.c.b16 %v1900, %v1899
      %v1906 = vsel %vm869, %v1880, 0
      %v1909 = vsel %vm869, %v1881, 0
      %1911 = vmatprep.subr.bf16.mxu0 0
      %1912 = vmatpush1.bf16.msra.mxu0 %v1901
      %1913 = vmatprep.subr.bf16.mxu0 0
      %1914 = vmatpush1.bf16.msra.mxu0 %v1902
      %1915 = vmatprep.subr.bf16.mxu0 0
      %1916 = vmatpush1.bf16.msra.mxu0 0
      %1917 = vmatprep.subr.bf16.mxu0 0
      %1918 = vmatpush1.bf16.msra.mxu0 0
      %1919 = vmatprep.subr.bf16.mxu0 0
      %1920 = vmatpush1.bf16.msra.mxu0 0
      %1921 = vmatprep.subr.bf16.mxu0 0
      %1922 = vmatpush1.bf16.msra.mxu0 0
      %1923 = vmatprep.subr.bf16.mxu0 0
      %1924 = vmatpush1.bf16.msra.mxu0 0
      %1925 = vmatprep.subr.bf16.mxu0 0
      %1926 = vmatpush1.bf16.msra.mxu0 0
      %1927 = vmatprep.subr.bf16.mxu0 0
      %1928 = vmatpush1.bf16.msra.mxu0 0
      %1929 = vmatprep.subr.bf16.mxu0 0
      %1930 = vmatpush1.bf16.msra.mxu0 0
      %1931 = vmatprep.subr.bf16.mxu0 0
      %1932 = vmatpush1.bf16.msra.mxu0 0
      %1933 = vmatprep.subr.bf16.mxu0 0
      %1934 = vmatpush1.bf16.msra.mxu0 0
      %1935 = vmatprep.subr.bf16.mxu0 0
      %1936 = vmatpush1.bf16.msra.mxu0 0
      %1937 = vmatprep.subr.bf16.mxu0 0
      %1938 = vmatpush1.bf16.msra.mxu0 0
      %1939 = vmatprep.subr.bf16.mxu0 0
      %1940 = vmatpush1.bf16.msra.mxu0 0
      %1941 = vmatprep.subr.bf16.mxu0 0
      %1942 = vmatpush1.bf16.msra.mxu0 0
      %1943 = vmatprep.mubr.bf16.mxu0 0
      %1944 = vmatmul.mubr.bf16.gmra.mrb[0].mxu0 %v1906
      %v1945 = vpop.f32.mrb[0].mxu0
      %v1946 = vadd.f32 %v1891, %v1945
      %v1947 = vpop.f32.mrb[0].mxu0
      %v1948 = vpop.f32.mrb[0].mxu0
      %v1949 = vadd.f32 %v1891, %v1948
      %v1950 = vpop.f32.mrb[0].mxu0
      %1951 = vmatprep.mubr.bf16.mxu0 0
      %1952 = vmatmul.mubr.bf16.gmra.mrb[0].mxu0 %v1909
      %v1953 = vpop.f32.mrb[0].mxu0
      %v1954 = vadd.f32 %v1891, %v1953
      %v1955 = vpop.f32.mrb[0].mxu0
      %v1956 = vpop.f32.mrb[0].mxu0
      %v1957 = vpop.f32.mrb[0].mxu0
      %1958 = vdwg.mxu0
      %v1959 = vmul.f32 %v1946, 0.5
      %v1960 = vmul.f32 %v1949, 0.5
      %v1961 = vmul.f32 %v1954, 0.5
      %v1962 = vmul.f32 %v1946, 0.70710677
      %v1963 = vmul.f32 %v1949, 0.70710677
      %v1964 = vmul.f32 %v1954, 0.70710677
      %vm1965 = vcmp.ge.f32.partialorder %v1962, 0.0
      %vm1966 = vcmp.ge.f32.partialorder %v1963, 0.0
      %vm1967 = vcmp.ge.f32.partialorder %v1964, 0.0
      %v1968 = vsel %vm1965, 1.0, -1.0
      %v1969 = vsel %vm1966, 1.0, -1.0
      %v1970 = vsel %vm1967, 1.0, -1.0
      %v1971 = vand.u32 2147483647, %v1962
      %v1972 = vand.u32 2147483647, %v1963
      %v1973 = vand.u32 2147483647, %v1964
      %v1974 = vmul.f32 %v1971, 0.3275911
      %v1975 = vmul.f32 %v1972, 0.3275911
      %v1976 = vmul.f32 %v1973, 0.3275911
      %v1977 = vadd.f32 %v1974, 1.0
      %v1978 = vadd.f32 %v1975, 1.0
      %v1979 = vadd.f32 %v1976, 1.0
      %v1980 = vrcp.pop %v1977
      %v1981 = vmul.f32 1.0, %v1980
      %v1982 = vrcp.pop %v1978
      %v1983 = vmul.f32 1.0, %v1982
      %v1984 = vrcp.pop %v1979
      %v1985 = vmul.f32 1.0, %v1984
      %v1986 = vmul.f32 %v1981, 1.0614054
      %v1987 = vmul.f32 %v1983, 1.0614054
      %v1988 = vmul.f32 %v1985, 1.0614054
      %v1989 = vadd.f32 %v1986, -1.4531521
      %v1990 = vadd.f32 %v1987, -1.4531521
      %v1991 = vadd.f32 %v1988, -1.4531521
      %v1992 = vmul.f32 %v1989, %v1981
      %v1993 = vmul.f32 %v1990, %v1983
      %v1994 = vmul.f32 %v1991, %v1985
      %v1995 = vadd.f32 %v1992, 1.4214138
      %v1996 = vadd.f32 %v1993, 1.4214138
      %v1997 = vadd.f32 %v1994, 1.4214138
      %v1998 = vmul.f32 %v1995, %v1981
      %v1999 = vmul.f32 %v1996, %v1983
      %v2000 = vmul.f32 %v1997, %v1985
      %v2001 = vadd.f32 %v1998, -0.28449672
      %v2002 = vadd.f32 %v1999, -0.28449672
      %v2003 = vadd.f32 %v2000, -0.28449672
      %v2004 = vmul.f32 %v2001, %v1981
      %v2005 = vmul.f32 %v2002, %v1983
      %v2006 = vmul.f32 %v2003, %v1985
      %v2007 = vadd.f32 %v2004, 0.2548296
      %v2008 = vadd.f32 %v2005, 0.2548296
      %v2009 = vadd.f32 %v2006, 0.2548296
      %v2010 = vmul.f32 %v2007, %v1981
      %v2011 = vmul.f32 %v2008, %v1983
      %v2012 = vmul.f32 %v2009, %v1985
      %v2013 = vsub.f32 0.0, %v1971
      %v2014 = vsub.f32 0.0, %v1972
      %v2015 = vsub.f32 0.0, %v1973
      %v2016 = vmul.f32 %v2013, %v1971
      %v2017 = vmul.f32 %v2014, %v1972
      %v2018 = vmul.f32 %v2015, %v1973
      %v2019 = vmul.f32 %v2016, 1.442695
      %v2020 = vpow.pop %v2019
      %v2021 = vmul.f32 %v2017, 1.442695
      %v2022 = vpow.pop %v2021
      %v2023 = vmul.f32 %v2018, 1.442695
      %v2024 = vpow.pop %v2023
      %v2025 = vmul.f32 %v2010, %v2020
      %v2026 = vmul.f32 %v2011, %v2022
      %v2027 = vmul.f32 %v2012, %v2024
      %v2028 = vsub.f32 1.0, %v2025
      %v2029 = vsub.f32 1.0, %v2026
      %v2030 = vsub.f32 1.0, %v2027
      %v2031 = vmul.f32 %v1968, %v2028
      %v2032 = vmul.f32 %v1969, %v2029
      %v2033 = vmul.f32 %v1970, %v2030
      %v2034 = vadd.f32 %v2031, 1.0
      %v2035 = vadd.f32 %v2032, 1.0
      %v2036 = vadd.f32 %v2033, 1.0
      %v2037 = vmul.f32 %v1959, %v2034
      %v2038 = vmul.f32 %v1960, %v2035
      %v2039 = vmul.f32 %v1961, %v2036
      %v2040 = vpack.c.bf16 %v2038, %v2037
      %v2041 = vpack.c.bf16 %v2039, %v2039
      %v2042 = vld [vmem:[%s744] sm:$0xf]
      %v2043 = vld [vmem:[%s744 + $0x4] sm:$0xf]
      %v2044 = vld [vmem:[%s744 + $0x8] sm:$0xf]
      %v2045 = vld [vmem:[%s744 + $0xc] sm:$0xf]
      %v2046 = vld [vmem:[%s744 + $0x10] sm:$0xf]
      %v2047 = vld [vmem:[%s744 + $0x14] sm:$0xf]
      %v2048 = vld [vmem:[%s744 + $0x18] sm:$0xf]
      %v2049 = vld [vmem:[%s744 + $0x1c] sm:$0xf]
      %v2050 = vld [vmem:[%s744 + $0x20] sm:$0xf]
      %v2051 = vld [vmem:[%s744 + $0x24] sm:$0xf]
      %v2052 = vld [vmem:[%s744 + $0x28] sm:$0xf]
      %v2053 = vld [vmem:[%s744 + $0x2c] sm:$0xf]
      %v2054 = vld [vmem:[%s744 + $0x30] sm:$0xf]
      %v2055 = vld [vmem:[%s744 + $0x34] sm:$0xf]
      %v2056 = vld [vmem:[%s744 + $0x38] sm:$0xf]
      %v2057 = vld [vmem:[%s744 + $0x3c] sm:$0xf]
      %v2058 = vld [vmem:[%s747] sm:$0x1]
      %v2060 = vlaneseq
      %v2061 = vshrl.u32 %v2060, 7
      %v2062 = vsub.s32 0, %v2061
      %v2063 = vrot.slane %v2058, %v2062
      %v2081 = vunpack.c.l.b16 %v2042
      %v2082 = vunpack.c.l.b16 %v2043
      %v2083 = vunpack.c.l.b16 %v2044
      %v2084 = vunpack.c.l.b16 %v2045
      %v2085 = vunpack.c.l.b16 %v2046
      %v2086 = vunpack.c.l.b16 %v2047
      %v2087 = vunpack.c.l.b16 %v2048
      %v2088 = vunpack.c.l.b16 %v2049
      %v2089 = vunpack.c.l.b16 %v2050
      %v2090 = vunpack.c.l.b16 %v2051
      %v2091 = vunpack.c.l.b16 %v2052
      %v2092 = vunpack.c.l.b16 %v2053
      %v2093 = vunpack.c.l.b16 %v2054
      %v2094 = vunpack.c.l.b16 %v2055
      %v2095 = vunpack.c.l.b16 %v2056
      %v2096 = vunpack.c.l.b16 %v2057
      %v2097 = vpack.c.b16 %v2082, %v2081
      %v2098 = vpack.c.b16 %v2084, %v2083
      %v2099 = vpack.c.b16 %v2086, %v2085
      %v2100 = vpack.c.b16 %v2088, %v2087
      %v2101 = vpack.c.b16 %v2090, %v2089
      %v2102 = vpack.c.b16 %v2092, %v2091
      %v2103 = vpack.c.b16 %v2094, %v2093
      %v2104 = vpack.c.b16 %v2096, %v2095
      %2113 = vmatprep.subr.bf16.mxu0 0
      %2114 = vmatpush1.bf16.msra.mxu0 %v2097
      %2115 = vmatprep.subr.bf16.mxu0 0
      %2116 = vmatpush1.bf16.msra.mxu0 %v2098
      %2117 = vmatprep.subr.bf16.mxu0 0
      %2118 = vmatpush1.bf16.msra.mxu0 %v2099
      %2119 = vmatprep.subr.bf16.mxu0 0
      %2120 = vmatpush1.bf16.msra.mxu0 %v2100
      %2121 = vmatprep.subr.bf16.mxu0 0
      %2122 = vmatpush1.bf16.msra.mxu0 %v2101
      %2123 = vmatprep.subr.bf16.mxu0 0
      %2124 = vmatpush1.bf16.msra.mxu0 %v2102
      %2125 = vmatprep.subr.bf16.mxu0 0
      %2126 = vmatpush1.bf16.msra.mxu0 %v2103
      %2127 = vmatprep.subr.bf16.mxu0 0
      %2128 = vmatpush1.bf16.msra.mxu0 %v2104
      %2129 = vmatprep.subr.bf16.mxu0 0
      %2130 = vmatpush1.bf16.msra.mxu0 0
      %2131 = vmatprep.subr.bf16.mxu0 0
      %2132 = vmatpush1.bf16.msra.mxu0 0
      %2133 = vmatprep.subr.bf16.mxu0 0
      %2134 = vmatpush1.bf16.msra.mxu0 0
      %2135 = vmatprep.subr.bf16.mxu0 0
      %2136 = vmatpush1.bf16.msra.mxu0 0
      %2137 = vmatprep.subr.bf16.mxu0 0
      %2138 = vmatpush1.bf16.msra.mxu0 0
      %2139 = vmatprep.subr.bf16.mxu0 0
      %2140 = vmatpush1.bf16.msra.mxu0 0
      %2141 = vmatprep.subr.bf16.mxu0 0
      %2142 = vmatpush1.bf16.msra.mxu0 0
      %2143 = vmatprep.subr.bf16.mxu0 0
      %2144 = vmatpush1.bf16.msra.mxu0 0
      %2145 = vmatprep.mubr.bf16.mxu0 0
      %2146 = vmatmul.mubr.bf16.gmra.mrb[0].mxu0 %v2040
      %v2147 = vpop.f32.mrb[0].mxu0
      %v2148 = vadd.f32 %v2063, %v2147
      %v2149 = vpop.f32.mrb[0].mxu0
      %v2150 = vpop.f32.mrb[0].mxu0
      %v2151 = vadd.f32 %v2063, %v2150
      %v2152 = vpop.f32.mrb[0].mxu0
      %2153 = vmatprep.mubr.bf16.mxu0 0
      %2154 = vmatmul.mubr.bf16.gmra.mrb[0].mxu0 %v2041
      %v2155 = vpop.f32.mrb[0].mxu0
      %v2156 = vadd.f32 %v2063, %v2155
      %v2157 = vpop.f32.mrb[0].mxu0
      %v2158 = vpop.f32.mrb[0].mxu0
      %v2159 = vpop.f32.mrb[0].mxu0
      %2160 = vdwg.mxu0
      %v2161 = vadd.f32 %v1818, %v2148
      %v2162 = vadd.f32 %v1819, %v2151
      %v2163 = vadd.f32 %v1820, %v2156
      %2164 = vst.msk [vmem:[#allocation2] sm:$0xff] %vm869, %v2161
      %2165 = vst.msk [vmem:[#allocation2 + $0x8] sm:$0xff] %vm869, %v2162
      %2166 = vst.msk [vmem:[#allocation2 + $0x10] sm:$0x1] %vm876, %v2163
      %p2167 = scmp.eq.s32.totalorder %s33, 1
      // Predicated region
      $region93: #{vit_forward.1} parent=87 // pred_check
        %p2168 = pneg %p2167
      $region94: #{vit_forward.1} parent=87 // pred_check_branch
        %2170 = sbr.rel (%p2168) target = $region96
      $region95: #{vit_forward.1} parent=87 // pred_region
        %v2171 = vld [vmem:[%s15] sm:$0x1]
        %v2172 = vld [vmem:[%s16] sm:$0x1]
        %v2173 = vsel %vm869, %v2161, 0.0
        %2174 = vadd.xlane.f32.xlu0 %v2173
        %v2175 = vpop.xlane.xlu0 %2174
        %v2176 = vsel %vm869, %v2162, 0.0
        %2177 = vadd.xlane.f32.xlu0 %v2176
        %v2178 = vpop.xlane.xlu0 %2177
        %v2179 = vsel %vm876, %v2163, 0.0
        %2180 = vadd.xlane.f32.xlu0 %v2179
        %v2181 = vpop.xlane.xlu0 %2180
        %v2182 = vmul.f32 %v2175, %v880
        %v2183 = vmul.f32 %v2178, %v880
        %v2184 = vmul.f32 %v2181, %v880
        %v2185 = vsub.f32 %v2161, %v2182
        %v2186 = vsub.f32 %v2162, %v2183
        %v2187 = vsub.f32 %v2163, %v2184
        %v2188 = vmul.f32 %v2185, %v2185
        %v2189 = vmul.f32 %v2186, %v2186
        %v2190 = vmul.f32 %v2187, %v2187
        %v2191 = vsel %vm869, %v2188, 0.0
        %2192 = vadd.xlane.f32.xlu0 %v2191
        %v2193 = vpop.xlane.xlu0 %2192
        %v2194 = vsel %vm869, %v2189, 0.0
        %2195 = vadd.xlane.f32.xlu0 %v2194
        %v2196 = vpop.xlane.xlu0 %2195
        %v2197 = vsel %vm876, %v2190, 0.0
        %2198 = vadd.xlane.f32.xlu0 %v2197
        %v2199 = vpop.xlane.xlu0 %2198
        %v2200 = vmul.f32 %v2193, %v880
        %v2201 = vmul.f32 %v2196, %v880
        %v2202 = vmul.f32 %v2199, %v880
        %v2203 = vadd.f32 %v2200, 1e-06
        %v2204 = vadd.f32 %v2201, 1e-06
        %v2205 = vadd.f32 %v2202, 1e-06
        %v2206 = vrsqrt.pop %v2203
        %v2207 = vrsqrt.pop %v2204
        %v2208 = vrsqrt.pop %v2205
        %v2209 = vmul.f32 %v2185, %v2206
        %v2210 = vmul.f32 %v2186, %v2207
        %v2211 = vmul.f32 %v2187, %v2208
        %v2213 = vlaneseq
        %v2214 = vshrl.u32 %v2213, 7
        %v2215 = vsub.s32 0, %v2214
        %v2216 = vrot.slane %v2171, %v2215
        %v2218 = vmul.f32 %v2209, %v2216
        %v2219 = vmul.f32 %v2210, %v2216
        %v2220 = vmul.f32 %v2211, %v2216
        %v2222 = vlaneseq
        %v2223 = vshrl.u32 %v2222, 7
        %v2224 = vsub.s32 0, %v2223
        %v2225 = vrot.slane %v2172, %v2224
        %v2227 = vadd.f32 %v2218, %v2225
        %v2228 = vadd.f32 %v2219, %v2225
        %v2229 = vadd.f32 %v2220, %v2225
        %2230 = vst.msk [vmem:[%s752] sm:$0xff] %vm869, %v2227
        %2231 = vst.msk [vmem:[%s752 + $0x8] sm:$0xff] %vm869, %v2228
        %2232 = vst.msk [vmem:[%s752 + $0x10] sm:$0x1] %vm876, %v2229
      $region96: #{vit_forward.1} parent=87 // pred_fallthru
        _
      %p2233 = scmp.lt.s32.totalorder %s32, 1
      %s2234 = scalar_select %p2233, %s32, 1
      %s2235 = smul.addr %s2234, 3
      %s2236 = smul.addr %s2235, 8
      %s2237 = scalar_lea.vmem %s17, %s2236
      // Predicated region
      $region97: #{vit_forward.1} parent=87 // pred_check
        %p2238 = pneg %p480
      $region98: #{vit_forward.1} parent=87 // pred_check_branch
        %2240 = sbr.rel (%p2238) target = $region100
      $region99: #{vit_forward.1} parent=87 // pred_region
        _
      $region100: #{vit_forward.1} parent=87 // pred_fallthru
        _
    $region88: #{vit_forward.1} parent=5 // pred_fallthru
      _
    %p2241 = scmp.le.s32.totalorder 2, %s23
    // Predicated region
    $region101: #{vit_forward.1} parent=5 // pred_check
      %p2242 = pneg %p2241
    $region102: #{vit_forward.1} parent=5 // pred_check_branch
      %2244 = sbr.rel (%p2242) target = $region104
    $region103: #{vit_forward.1} parent=5 // pred_region
      %s2245 = ssub.s32 %s23, 2
      // Predicated region
      $region105: #{vit_forward.1} parent=103 // pred_check
        %p2246 = pneg %p486
      $region106: #{vit_forward.1} parent=103 // pred_check_branch
        %2248 = sbr.rel (%p2246) target = $region108
      $region107: #{vit_forward.1} parent=103 // pred_region
        %p2249 = scmp.lt.s32.totalorder %s34, 1
        %s2250 = scalar_select %p2249, %s34, 1
        %s2251 = smul.addr %s2250, 3
        %s2252 = smul.addr %s2251, 8
        %s2253 = scalar_lea.vmem %s17, %s2252
      $region108: #{vit_forward.1} parent=103 // pred_fallthru
        _
    $region104: #{vit_forward.1} parent=5 // pred_fallthru
      _
  $region6: #{vit_forward.1} parent=0 // loop_footer
    %s27 = sadd.s32 1, %s23
  $region7: #{vit_forward.1} parent=0 // loop_footer_branch
    %22 = sbr.rel target = $region3
  $region8: #{vit_forward.1} parent=0 // loop_exit
    _

</llo_original>
